<compile_context>
chip_gen: v7x
topology: tpu7x:2x2x1
jax: 0.10.0
libtpu: 0.0.40
codegen_flags: <defaults>
</compile_context>

<pallas_src>
import functools
import math

import jax
import jax.numpy as jnp
from jax.experimental import pallas as pl
from jax.experimental.pallas import tpu as pltpu  # noqa: F401 (TPU backend)

# Small synthetic config (module defaults are d_model=1024, heads=8; same
# structure at TPU-friendly small sizes).
D = 128              # d_model
N_HEAD = 4
HEAD_DIM = D // N_HEAD
HIDDEN = 4 * D       # mlp hidden
EPS = 1e-5


def _layernorm(x, w, b):
    # x: (M, D) fp32, w/b: (1, D) fp32
    mu = jnp.mean(x, axis=-1, keepdims=True)
    var = jnp.mean((x - mu) ** 2, axis=-1, keepdims=True)
    return (x - mu) * jax.lax.rsqrt(var + EPS) * w + b


# ---------------------------------------------------------------------------
# Fused residual-attention-block kernel (single program, no grid)
# ---------------------------------------------------------------------------
def _resblock_kernel(x_ref, ln1w, ln1b, wqkv, bqkv, wo, bo,
                     ln2w, ln2b, wfc, bfc, wpr, bpr, o_ref,
                     *, batch, seq, n_head):
    d = x_ref.shape[-1]
    head_dim = d // n_head

    x = x_ref[...].astype(jnp.float32)                          # (B*T, D)

    # ---- attention branch: x + out_proj(MHA(ln_1(x))) ----
    h = _layernorm(x, ln1w[...], ln1b[...])
    qkv = jnp.dot(h.astype(jnp.bfloat16), wqkv[...],
                  preferred_element_type=jnp.float32) + bqkv[...]   # (B*T, 3D)
    # 1/sqrt(head_dim) is already folded into the q slice of wqkv/bqkv.
    q = qkv[:, 0:d].astype(jnp.bfloat16)
    k = qkv[:, d:2 * d].astype(jnp.bfloat16)
    v = qkv[:, 2 * d:3 * d].astype(jnp.bfloat16)

    def to_heads(t):
        # (B*T, D) -> (H*B, T, head_dim): one contiguous lane slice per head,
        # rows split (B*T -> B, T) at a sublane-tile boundary, heads stacked
        # on the leading (batch) axis so the attention matmuls are batched.
        return jnp.concatenate(
            [t[:, hh * head_dim:(hh + 1) * head_dim]
               .reshape(batch, seq, head_dim) for hh in range(n_head)],
            axis=0)

    qh = to_heads(q)                                            # (H*B, T, hd)
    kh = to_heads(k)
    vh = to_heads(v)

    # batched scores + softmax over all (head, batch) pairs at once
    s = jnp.einsum("bqd,bkd->bqk", qh, kh,
                   preferred_element_type=jnp.float32)          # (H*B, T, T)
    s = s - jnp.max(s, axis=-1, keepdims=True)
    p = jnp.exp(s)
    p = p * pl.reciprocal(jnp.sum(p, axis=-1, keepdims=True), approx=True)
    hv = jnp.einsum("bqk,bkd->bqd", p.astype(jnp.bfloat16), vh,
                    preferred_element_type=jnp.float32)         # (H*B, T, hd)

    # Reassemble the (B*T, D) slab (heads back onto the lane axis), then ONE
    # full-depth out-projection matmul.
    attn_cat = jnp.concatenate(
        [hv[hh * batch:(hh + 1) * batch].reshape(batch * seq, head_dim)
         for hh in range(n_head)], axis=-1)                     # (B*T, D)
    attn = jnp.dot(attn_cat.astype(jnp.bfloat16), wo[...],
                   preferred_element_type=jnp.float32) + bo[...]
    x = x + attn

    # ---- MLP branch: x + c_proj(QuickGELU(c_fc(ln_2(x)))) ----
    h2 = _layernorm(x, ln2w[...], ln2b[...])
    f = jnp.dot(h2.astype(jnp.bfloat16), wfc[...],
                preferred_element_type=jnp.float32) + bfc[...]
    f = f * jax.nn.sigmoid(1.702 * f)                           # QuickGELU
    m = jnp.dot(f.astype(jnp.bfloat16), wpr[...],
                preferred_element_type=jnp.float32) + bpr[...]

    o_ref[...] = (x + m).astype(o_ref.dtype)


# ---------------------------------------------------------------------------
# Wrapper
# ---------------------------------------------------------------------------
@functools.partial(jax.jit, static_argnames=("n_head",))
def residual_attention_block(x, p, *, n_head=N_HEAD):
    """x: (B, T, D) fp32; p: kernel params (see kernel_params)."""
    B, T, d = x.shape
    xf = x.reshape(B * T, d)                    # fold batch into matmul M dim
    kernel = functools.partial(_resblock_kernel, batch=B, seq=T, n_head=n_head)
    out = pl.pallas_call(
        kernel,
        out_shape=jax.ShapeDtypeStruct((B * T, d), x.dtype),
        input_output_aliases={0: 0},            # out reuses the x slab buffer
    )(xf, p["ln1w"], p["ln1b"], p["wqkv"], p["bqkv"], p["wo"], p["bo"],
      p["ln2w"], p["ln2b"], p["wfc"], p["bfc"], p["wpr"], p["bpr"])
    return out.reshape(B, T, d)


# ---------------------------------------------------------------------------
# Parameters (synthetic; shapes follow the PyTorch module, stored transposed
# so that y = x @ w + b)
# ---------------------------------------------------------------------------
def init_base_params(key, d=D, hidden=HIDDEN):
    ks = jax.random.split(key, 12)

    def nrm(k, shape, std=0.02):
        return jax.random.normal(k, shape, jnp.float32) * std

    return dict(
        ln1w=jnp.ones((1, d), jnp.float32), ln1b=jnp.zeros((1, d), jnp.float32),
        wq=nrm(ks[0], (d, d)), wk=nrm(ks[1], (d, d)), wv=nrm(ks[2], (d, d)),
        bq=nrm(ks[3], (1, d)), bk=nrm(ks[4], (1, d)), bv=nrm(ks[5], (1, d)),
        wo=nrm(ks[6], (d, d)), bo=nrm(ks[7], (1, d)),
        ln2w=jnp.ones((1, d), jnp.float32), ln2b=jnp.zeros((1, d), jnp.float32),
        wfc=nrm(ks[8], (d, hidden)), bfc=nrm(ks[9], (1, hidden)),
        wpr=nrm(ks[10], (hidden, d)), bpr=nrm(ks[11], (1, d)),
    )


def kernel_params(base, n_head=N_HEAD):
    """Fuse QKV, fold the softmax scale into q, cast weights to bf16."""
    d = base["wq"].shape[0]
    scale = 1.0 / math.sqrt(d // n_head)
    wqkv = jnp.concatenate([base["wq"] * scale, base["wk"], base["wv"]], axis=1)
    bqkv = jnp.concatenate([base["bq"] * scale, base["bk"], base["bv"]], axis=1)
    return dict(
        ln1w=base["ln1w"], ln1b=base["ln1b"],
        wqkv=wqkv.astype(jnp.bfloat16), bqkv=bqkv,
        wo=base["wo"].astype(jnp.bfloat16), bo=base["bo"],
        ln2w=base["ln2w"], ln2b=base["ln2b"],
        wfc=base["wfc"].astype(jnp.bfloat16), bfc=base["bfc"],
        wpr=base["wpr"].astype(jnp.bfloat16), bpr=base["bpr"],
    )


# ---------------------------------------------------------------------------
# Pure-JAX reference (mirrors PyTorch ResidualAttentionBlock math, fp32)
# ---------------------------------------------------------------------------
def reference(x, p, *, n_head=N_HEAD):
    def ln(v, w, b):
        mu = v.mean(-1, keepdims=True)
        var = ((v - mu) ** 2).mean(-1, keepdims=True)
        return (v - mu) / jnp.sqrt(var + EPS) * w + b

    B, T, d = x.shape
    hd = d // n_head
    a = ln(x, p["ln1w"], p["ln1b"])
    q = a @ p["wq"] + p["bq"]
    k = a @ p["wk"] + p["bk"]
    v = a @ p["wv"] + p["bv"]

    def split(t):
        return t.reshape(B, T, n_head, hd).transpose(0, 2, 1, 3)

    qh, kh, vh = split(q), split(k), split(v)
    s = jnp.einsum("bhqd,bhkd->bhqk", qh, kh) / math.sqrt(hd)
    pr = jax.nn.softmax(s, axis=-1)
    o = jnp.einsum("bhqk,bhkd->bhqd", pr, vh).transpose(0, 2, 1, 3).reshape(B, T, d)
    x = x + (o @ p["wo"] + p["bo"])
    m = ln(x, p["ln2w"], p["ln2b"])
    f = m @ p["wfc"] + p["bfc"]
    f = f * jax.nn.sigmoid(1.702 * f)
    return x + (f @ p["wpr"] + p["bpr"])


if __name__ == "__main__":
    key = jax.random.PRNGKey(0)
    kx, kw = jax.random.split(key)
    B, T = 2, 16                                    # small batch / sequence
    x = jax.random.normal(kx, (B, T, D), jnp.float32)

    base = init_base_params(kw)
    kparams = kernel_params(base)

    # reference first (kernel input slab is internally aliased to its output)
    ref = reference(x, base)

    out = residual_attention_block(x, kparams)
    out = jax.block_until_ready(out)
    assert out.shape == (B, T, D), out.shape

    err = float(jnp.max(jnp.abs(out - ref)))
    if not (err < 5e-2):
        raise AssertionError(f"kernel/reference mismatch, max abs err = {err}")
    print("KERNEL_OK")
</pallas_src>

<mosaic_0001>
module attributes {stable_mosaic.version = 11 : i64} {
  func.func @_resblock_kernel(%arg0: memref<32x128xf32, #tpu.memory_space<vmem>>, %arg1: memref<1x128xf32, #tpu.memory_space<vmem>>, %arg2: memref<1x128xf32, #tpu.memory_space<vmem>>, %arg3: memref<128x384xbf16, #tpu.memory_space<vmem>>, %arg4: memref<1x384xf32, #tpu.memory_space<vmem>>, %arg5: memref<128x128xbf16, #tpu.memory_space<vmem>>, %arg6: memref<1x128xf32, #tpu.memory_space<vmem>>, %arg7: memref<1x128xf32, #tpu.memory_space<vmem>>, %arg8: memref<1x128xf32, #tpu.memory_space<vmem>>, %arg9: memref<128x512xbf16, #tpu.memory_space<vmem>>, %arg10: memref<1x512xf32, #tpu.memory_space<vmem>>, %arg11: memref<512x128xbf16, #tpu.memory_space<vmem>>, %arg12: memref<1x128xf32, #tpu.memory_space<vmem>>, %arg13: memref<32x128xf32, #tpu.memory_space<vmem>>) attributes {dimension_semantics = [], scalar_prefetch = 0 : i64, scratch_operands = 0 : i64, tpu.core_type = #tpu.core_type<tc>} {
    %c0 = arith.constant 0 : index
    %c0_0 = arith.constant 0 : index
    %0 = vector.load %arg0[%c0, %c0_0] : memref<32x128xf32, #tpu.memory_space<vmem>>, vector<32x128xf32>
    %c0_1 = arith.constant 0 : index
    %c0_2 = arith.constant 0 : index
    %1 = vector.load %arg1[%c0_1, %c0_2] : memref<1x128xf32, #tpu.memory_space<vmem>>, vector<1x128xf32>
    %c0_3 = arith.constant 0 : index
    %c0_4 = arith.constant 0 : index
    %2 = vector.load %arg2[%c0_3, %c0_4] : memref<1x128xf32, #tpu.memory_space<vmem>>, vector<1x128xf32>
    %cst = arith.constant dense<0.000000e+00> : vector<32xf32>
    %3 = vector.multi_reduction <add>, %0, %cst [1] : vector<32x128xf32> to vector<32xf32>
    %4 = vector.shape_cast %3 : vector<32xf32> to vector<32x1xf32>
    %cst_5 = arith.constant 1.280000e+02 : f32
    %5 = vector.broadcast %cst_5 : f32 to vector<32x1xf32>
    %6 = arith.divf %4, %5 : vector<32x1xf32>
    %7 = vector.broadcast %6 : vector<32x1xf32> to vector<32x128xf32>
    %8 = arith.subf %0, %7 : vector<32x128xf32>
    %9 = arith.mulf %8, %8 : vector<32x128xf32>
    %cst_6 = arith.constant dense<0.000000e+00> : vector<32xf32>
    %10 = vector.multi_reduction <add>, %9, %cst_6 [1] : vector<32x128xf32> to vector<32xf32>
    %11 = vector.shape_cast %10 : vector<32xf32> to vector<32x1xf32>
    %cst_7 = arith.constant 1.280000e+02 : f32
    %12 = vector.broadcast %cst_7 : f32 to vector<32x1xf32>
    %13 = arith.divf %11, %12 : vector<32x1xf32>
    %14 = vector.broadcast %6 : vector<32x1xf32> to vector<32x128xf32>
    %15 = arith.subf %0, %14 : vector<32x128xf32>
    %cst_8 = arith.constant 9.99999974E-6 : f32
    %16 = vector.broadcast %cst_8 : f32 to vector<32x1xf32>
    %17 = arith.addf %13, %16 : vector<32x1xf32>
    %18 = math.rsqrt %17 : vector<32x1xf32>
    %19 = vector.broadcast %18 : vector<32x1xf32> to vector<32x128xf32>
    %20 = arith.mulf %15, %19 : vector<32x128xf32>
    %21 = vector.broadcast %1 : vector<1x128xf32> to vector<32x128xf32>
    %22 = arith.mulf %20, %21 : vector<32x128xf32>
    %23 = vector.broadcast %2 : vector<1x128xf32> to vector<32x128xf32>
    %24 = arith.addf %22, %23 : vector<32x128xf32>
    %25 = arith.truncf %24 : vector<32x128xf32> to vector<32x128xbf16>
    %c0_9 = arith.constant 0 : index
    %c0_10 = arith.constant 0 : index
    %26 = vector.load %arg3[%c0_9, %c0_10] : memref<128x384xbf16, #tpu.memory_space<vmem>>, vector<128x384xbf16>
    %cst_11 = arith.constant dense<0.000000e+00> : vector<32x384xf32>
    %27 = tpu.matmul %25, %26, %cst_11 {dimension_numbers = #tpu.dot_dimension_numbers<[1], [0], [0], [1], [0, 0, 1, 1], [], []>} : vector<32x128xbf16>, vector<128x384xbf16>, vector<32x384xf32> -> vector<32x384xf32>
    %c0_12 = arith.constant 0 : index
    %c0_13 = arith.constant 0 : index
    %28 = vector.load %arg4[%c0_12, %c0_13] : memref<1x384xf32, #tpu.memory_space<vmem>>, vector<1x384xf32>
    %29 = vector.broadcast %28 : vector<1x384xf32> to vector<32x384xf32>
    %30 = arith.addf %27, %29 : vector<32x384xf32>
    %31 = vector.extract_strided_slice %30 {offsets = [0, 0], sizes = [32, 128], strides = [1, 1]} : vector<32x384xf32> to vector<32x128xf32>
    %32 = arith.truncf %31 : vector<32x128xf32> to vector<32x128xbf16>
    %33 = vector.extract_strided_slice %30 {offsets = [0, 128], sizes = [32, 128], strides = [1, 1]} : vector<32x384xf32> to vector<32x128xf32>
    %34 = arith.truncf %33 : vector<32x128xf32> to vector<32x128xbf16>
    %35 = vector.extract_strided_slice %30 {offsets = [0, 256], sizes = [32, 128], strides = [1, 1]} : vector<32x384xf32> to vector<32x128xf32>
    %36 = arith.truncf %35 : vector<32x128xf32> to vector<32x128xbf16>
    %37 = vector.extract_strided_slice %32 {offsets = [0, 0], sizes = [32, 32], strides = [1, 1]} : vector<32x128xbf16> to vector<32x32xbf16>
    %38 = vector.shape_cast %37 : vector<32x32xbf16> to vector<2x16x32xbf16>
    %39 = vector.extract_strided_slice %32 {offsets = [0, 32], sizes = [32, 32], strides = [1, 1]} : vector<32x128xbf16> to vector<32x32xbf16>
    %40 = vector.shape_cast %39 : vector<32x32xbf16> to vector<2x16x32xbf16>
    %41 = vector.extract_strided_slice %32 {offsets = [0, 64], sizes = [32, 32], strides = [1, 1]} : vector<32x128xbf16> to vector<32x32xbf16>
    %42 = vector.shape_cast %41 : vector<32x32xbf16> to vector<2x16x32xbf16>
    %43 = vector.extract_strided_slice %32 {offsets = [0, 96], sizes = [32, 32], strides = [1, 1]} : vector<32x128xbf16> to vector<32x32xbf16>
    %44 = vector.shape_cast %43 : vector<32x32xbf16> to vector<2x16x32xbf16>
    %45 = tpu.concatenate %38, %40, %42, %44 in 0 : vector<2x16x32xbf16>, vector<2x16x32xbf16>, vector<2x16x32xbf16>, vector<2x16x32xbf16> -> vector<8x16x32xbf16>
    %46 = vector.extract_strided_slice %34 {offsets = [0, 0], sizes = [32, 32], strides = [1, 1]} : vector<32x128xbf16> to vector<32x32xbf16>
    %47 = vector.shape_cast %46 : vector<32x32xbf16> to vector<2x16x32xbf16>
    %48 = vector.extract_strided_slice %34 {offsets = [0, 32], sizes = [32, 32], strides = [1, 1]} : vector<32x128xbf16> to vector<32x32xbf16>
    %49 = vector.shape_cast %48 : vector<32x32xbf16> to vector<2x16x32xbf16>
    %50 = vector.extract_strided_slice %34 {offsets = [0, 64], sizes = [32, 32], strides = [1, 1]} : vector<32x128xbf16> to vector<32x32xbf16>
    %51 = vector.shape_cast %50 : vector<32x32xbf16> to vector<2x16x32xbf16>
    %52 = vector.extract_strided_slice %34 {offsets = [0, 96], sizes = [32, 32], strides = [1, 1]} : vector<32x128xbf16> to vector<32x32xbf16>
    %53 = vector.shape_cast %52 : vector<32x32xbf16> to vector<2x16x32xbf16>
    %54 = tpu.concatenate %47, %49, %51, %53 in 0 : vector<2x16x32xbf16>, vector<2x16x32xbf16>, vector<2x16x32xbf16>, vector<2x16x32xbf16> -> vector<8x16x32xbf16>
    %55 = vector.extract_strided_slice %36 {offsets = [0, 0], sizes = [32, 32], strides = [1, 1]} : vector<32x128xbf16> to vector<32x32xbf16>
    %56 = vector.shape_cast %55 : vector<32x32xbf16> to vector<2x16x32xbf16>
    %57 = vector.extract_strided_slice %36 {offsets = [0, 32], sizes = [32, 32], strides = [1, 1]} : vector<32x128xbf16> to vector<32x32xbf16>
    %58 = vector.shape_cast %57 : vector<32x32xbf16> to vector<2x16x32xbf16>
    %59 = vector.extract_strided_slice %36 {offsets = [0, 64], sizes = [32, 32], strides = [1, 1]} : vector<32x128xbf16> to vector<32x32xbf16>
    %60 = vector.shape_cast %59 : vector<32x32xbf16> to vector<2x16x32xbf16>
    %61 = vector.extract_strided_slice %36 {offsets = [0, 96], sizes = [32, 32], strides = [1, 1]} : vector<32x128xbf16> to vector<32x32xbf16>
    %62 = vector.shape_cast %61 : vector<32x32xbf16> to vector<2x16x32xbf16>
    %63 = tpu.concatenate %56, %58, %60, %62 in 0 : vector<2x16x32xbf16>, vector<2x16x32xbf16>, vector<2x16x32xbf16>, vector<2x16x32xbf16> -> vector<8x16x32xbf16>
    "tpu.trace_start"() <{level = 10 : i32, message = "bqd,bkd->bqk"}> : () -> ()
    %cst_14 = arith.constant dense<0.000000e+00> : vector<8x16x16xf32>
    %64 = tpu.matmul %45, %54, %cst_14 {dimension_numbers = #tpu.dot_dimension_numbers<[2], [2], [1], [1], [0, 0, 0, 1, 1, 1], [0], [0]>} : vector<8x16x32xbf16>, vector<8x16x32xbf16>, vector<8x16x16xf32> -> vector<8x16x16xf32>
    "tpu.trace_stop"() : () -> ()
    %cst_15 = arith.constant dense<0xFF800000> : vector<8x16xf32>
    %65 = vector.multi_reduction <maximumf>, %64, %cst_15 [2] : vector<8x16x16xf32> to vector<8x16xf32>
    %66 = vector.shape_cast %65 : vector<8x16xf32> to vector<8x16x1xf32>
    %67 = vector.broadcast %66 : vector<8x16x1xf32> to vector<8x16x16xf32>
    %68 = arith.subf %64, %67 : vector<8x16x16xf32>
    %69 = math.exp %68 : vector<8x16x16xf32>
    %cst_16 = arith.constant dense<0.000000e+00> : vector<8x16xf32>
    %70 = vector.multi_reduction <add>, %69, %cst_16 [2] : vector<8x16x16xf32> to vector<8x16xf32>
    %71 = vector.shape_cast %70 : vector<8x16xf32> to vector<8x16x1xf32>
    %72 = tpu.reciprocal %71 {approx = true} : vector<8x16x1xf32> -> vector<8x16x1xf32>
    %73 = vector.broadcast %72 : vector<8x16x1xf32> to vector<8x16x16xf32>
    %74 = arith.mulf %69, %73 : vector<8x16x16xf32>
    %75 = arith.truncf %74 : vector<8x16x16xf32> to vector<8x16x16xbf16>
    "tpu.trace_start"() <{level = 10 : i32, message = "bqk,bkd->bqd"}> : () -> ()
    %cst_17 = arith.constant dense<0.000000e+00> : vector<8x16x32xf32>
    %76 = tpu.matmul %75, %63, %cst_17 {dimension_numbers = #tpu.dot_dimension_numbers<[2], [1], [1], [2], [0, 0, 0, 1, 1, 2], [0], [0]>} : vector<8x16x16xbf16>, vector<8x16x32xbf16>, vector<8x16x32xf32> -> vector<8x16x32xf32>
    "tpu.trace_stop"() : () -> ()
    %77 = vector.extract_strided_slice %76 {offsets = [0, 0, 0], sizes = [2, 16, 32], strides = [1, 1, 1]} : vector<8x16x32xf32> to vector<2x16x32xf32>
    %78 = vector.shape_cast %77 : vector<2x16x32xf32> to vector<32x32xf32>
    %79 = vector.extract_strided_slice %76 {offsets = [2, 0, 0], sizes = [2, 16, 32], strides = [1, 1, 1]} : vector<8x16x32xf32> to vector<2x16x32xf32>
    %80 = vector.shape_cast %79 : vector<2x16x32xf32> to vector<32x32xf32>
    %81 = vector.extract_strided_slice %76 {offsets = [4, 0, 0], sizes = [2, 16, 32], strides = [1, 1, 1]} : vector<8x16x32xf32> to vector<2x16x32xf32>
    %82 = vector.shape_cast %81 : vector<2x16x32xf32> to vector<32x32xf32>
    %83 = vector.extract_strided_slice %76 {offsets = [6, 0, 0], sizes = [2, 16, 32], strides = [1, 1, 1]} : vector<8x16x32xf32> to vector<2x16x32xf32>
    %84 = vector.shape_cast %83 : vector<2x16x32xf32> to vector<32x32xf32>
    %85 = tpu.concatenate %78, %80, %82, %84 in 1 : vector<32x32xf32>, vector<32x32xf32>, vector<32x32xf32>, vector<32x32xf32> -> vector<32x128xf32>
    %86 = arith.truncf %85 : vector<32x128xf32> to vector<32x128xbf16>
    %c0_18 = arith.constant 0 : index
    %c0_19 = arith.constant 0 : index
    %87 = vector.load %arg5[%c0_18, %c0_19] : memref<128x128xbf16, #tpu.memory_space<vmem>>, vector<128x128xbf16>
    %cst_20 = arith.constant dense<0.000000e+00> : vector<32x128xf32>
    %88 = tpu.matmul %86, %87, %cst_20 {dimension_numbers = #tpu.dot_dimension_numbers<[1], [0], [0], [1], [0, 0, 1, 1], [], []>} : vector<32x128xbf16>, vector<128x128xbf16>, vector<32x128xf32> -> vector<32x128xf32>
    %c0_21 = arith.constant 0 : index
    %c0_22 = arith.constant 0 : index
    %89 = vector.load %arg6[%c0_21, %c0_22] : memref<1x128xf32, #tpu.memory_space<vmem>>, vector<1x128xf32>
    %90 = vector.broadcast %89 : vector<1x128xf32> to vector<32x128xf32>
    %91 = arith.addf %88, %90 : vector<32x128xf32>
    %92 = arith.addf %0, %91 : vector<32x128xf32>
    %c0_23 = arith.constant 0 : index
    %c0_24 = arith.constant 0 : index
    %93 = vector.load %arg7[%c0_23, %c0_24] : memref<1x128xf32, #tpu.memory_space<vmem>>, vector<1x128xf32>
    %c0_25 = arith.constant 0 : index
    %c0_26 = arith.constant 0 : index
    %94 = vector.load %arg8[%c0_25, %c0_26] : memref<1x128xf32, #tpu.memory_space<vmem>>, vector<1x128xf32>
    %cst_27 = arith.constant dense<0.000000e+00> : vector<32xf32>
    %95 = vector.multi_reduction <add>, %92, %cst_27 [1] : vector<32x128xf32> to vector<32xf32>
    %96 = vector.shape_cast %95 : vector<32xf32> to vector<32x1xf32>
    %cst_28 = arith.constant 1.280000e+02 : f32
    %97 = vector.broadcast %cst_28 : f32 to vector<32x1xf32>
    %98 = arith.divf %96, %97 : vector<32x1xf32>
    %99 = vector.broadcast %98 : vector<32x1xf32> to vector<32x128xf32>
    %100 = arith.subf %92, %99 : vector<32x128xf32>
    %101 = arith.mulf %100, %100 : vector<32x128xf32>
    %cst_29 = arith.constant dense<0.000000e+00> : vector<32xf32>
    %102 = vector.multi_reduction <add>, %101, %cst_29 [1] : vector<32x128xf32> to vector<32xf32>
    %103 = vector.shape_cast %102 : vector<32xf32> to vector<32x1xf32>
    %cst_30 = arith.constant 1.280000e+02 : f32
    %104 = vector.broadcast %cst_30 : f32 to vector<32x1xf32>
    %105 = arith.divf %103, %104 : vector<32x1xf32>
    %106 = vector.broadcast %98 : vector<32x1xf32> to vector<32x128xf32>
    %107 = arith.subf %92, %106 : vector<32x128xf32>
    %cst_31 = arith.constant 9.99999974E-6 : f32
    %108 = vector.broadcast %cst_31 : f32 to vector<32x1xf32>
    %109 = arith.addf %105, %108 : vector<32x1xf32>
    %110 = math.rsqrt %109 : vector<32x1xf32>
    %111 = vector.broadcast %110 : vector<32x1xf32> to vector<32x128xf32>
    %112 = arith.mulf %107, %111 : vector<32x128xf32>
    %113 = vector.broadcast %93 : vector<1x128xf32> to vector<32x128xf32>
    %114 = arith.mulf %112, %113 : vector<32x128xf32>
    %115 = vector.broadcast %94 : vector<1x128xf32> to vector<32x128xf32>
    %116 = arith.addf %114, %115 : vector<32x128xf32>
    %117 = arith.truncf %116 : vector<32x128xf32> to vector<32x128xbf16>
    %c0_32 = arith.constant 0 : index
    %c0_33 = arith.constant 0 : index
    %118 = vector.load %arg9[%c0_32, %c0_33] : memref<128x512xbf16, #tpu.memory_space<vmem>>, vector<128x512xbf16>
    %cst_34 = arith.constant dense<0.000000e+00> : vector<32x512xf32>
    %119 = tpu.matmul %117, %118, %cst_34 {dimension_numbers = #tpu.dot_dimension_numbers<[1], [0], [0], [1], [0, 0, 1, 1], [], []>} : vector<32x128xbf16>, vector<128x512xbf16>, vector<32x512xf32> -> vector<32x512xf32>
    %c0_35 = arith.constant 0 : index
    %c0_36 = arith.constant 0 : index
    %120 = vector.load %arg10[%c0_35, %c0_36] : memref<1x512xf32, #tpu.memory_space<vmem>>, vector<1x512xf32>
    %121 = vector.broadcast %120 : vector<1x512xf32> to vector<32x512xf32>
    %122 = arith.addf %119, %121 : vector<32x512xf32>
    %cst_37 = arith.constant 1.702000e+00 : f32
    %123 = vector.broadcast %cst_37 : f32 to vector<32x512xf32>
    %124 = arith.mulf %123, %122 : vector<32x512xf32>
    %125 = arith.negf %124 : vector<32x512xf32>
    %126 = math.exp %125 : vector<32x512xf32>
    %cst_38 = arith.constant 1.000000e+00 : f32
    %127 = vector.broadcast %cst_38 : f32 to vector<32x512xf32>
    %128 = arith.addf %127, %126 : vector<32x512xf32>
    %129 = arith.divf %127, %128 : vector<32x512xf32>
    %130 = arith.mulf %122, %129 : vector<32x512xf32>
    %131 = arith.truncf %130 : vector<32x512xf32> to vector<32x512xbf16>
    %c0_39 = arith.constant 0 : index
    %c0_40 = arith.constant 0 : index
    %132 = vector.load %arg11[%c0_39, %c0_40] : memref<512x128xbf16, #tpu.memory_space<vmem>>, vector<512x128xbf16>
    %cst_41 = arith.constant dense<0.000000e+00> : vector<32x128xf32>
    %133 = tpu.matmul %131, %132, %cst_41 {dimension_numbers = #tpu.dot_dimension_numbers<[1], [0], [0], [1], [0, 0, 1, 1], [], []>} : vector<32x512xbf16>, vector<512x128xbf16>, vector<32x128xf32> -> vector<32x128xf32>
    %c0_42 = arith.constant 0 : index
    %c0_43 = arith.constant 0 : index
    %134 = vector.load %arg12[%c0_42, %c0_43] : memref<1x128xf32, #tpu.memory_space<vmem>>, vector<1x128xf32>
    %135 = vector.broadcast %134 : vector<1x128xf32> to vector<32x128xf32>
    %136 = arith.addf %133, %135 : vector<32x128xf32>
    %137 = arith.addf %92, %136 : vector<32x128xf32>
    %c0_44 = arith.constant 0 : index
    %c0_45 = arith.constant 0 : index
    %138 = vector.load %arg13[%c0_44, %c0_45] : memref<32x128xf32, #tpu.memory_space<vmem>>, vector<32x128xf32>
    tpu.vector_store %arg13[%c0_44, %c0_45], %137 {strides = array<i32>} : memref<32x128xf32, #tpu.memory_space<vmem>>, vector<32x128xf32>,
    return
  }
}

</mosaic_0001>

<llo_original>
// kernel: residual_attention_block.1
$region0: #{residual_attention_block.1}
  #allocation0 [shape = 'u32[]', space=smem, size = 0x4, offset = 0x4, fixed_abs, tag = 'smem constant byte address 0x4 - core index']
  #allocation1 [shape = 'u32[144,128]{1,0:T(1,128)}', space=vmem, size = 0x12000, scoped, tag = 'internal scratch']
  %s0 = inlined_call_operand.vmem [shape: f32[32,128], index: 0, kind: input, shape index: {}, may-alias: {0,13}]
  %s1 = inlined_call_operand.vmem [shape: f32[1,128], index: 1, kind: input, shape index: {}]
  %s2 = inlined_call_operand.vmem [shape: f32[1,128], index: 2, kind: input, shape index: {}]
  %s3 = inlined_call_operand.hbm [shape: bf16[128,384], index: 3, kind: input, shape index: {}]
  %s4 = inlined_call_operand.vmem [shape: f32[1,384], index: 4, kind: input, shape index: {}]
  %s5 = inlined_call_operand.vmem [shape: bf16[128,128], index: 5, kind: input, shape index: {}]
  %s6 = inlined_call_operand.hbm [shape: f32[1,128], index: 6, kind: input, shape index: {}]
  %s7 = inlined_call_operand.hbm [shape: f32[1,128], index: 7, kind: input, shape index: {}]
  %s8 = inlined_call_operand.hbm [shape: f32[1,128], index: 8, kind: input, shape index: {}]
  %s9 = inlined_call_operand.hbm [shape: bf16[128,512], index: 9, kind: input, shape index: {}]
  %s10 = inlined_call_operand.vmem [shape: f32[1,512], index: 10, kind: input, shape index: {}]
  %s11 = inlined_call_operand.hbm [shape: bf16[512,128], index: 11, kind: input, shape index: {}]
  %s12 = inlined_call_operand.hbm [shape: f32[1,128], index: 12, kind: input, shape index: {}]
  %s13 = inlined_call_operand.vmem [shape: f32[32,128], index: 13, kind: output, shape index: {}, may-alias: {0,13}]
  %s14 = sld [smem:[#allocation0]]
  $region90: #{residual_attention_block.1} parent=0
    _
  %s16 = ssub.s32 1, %s14
  %s17 = scalar_select 0, %s16, %s14
  $region1: #{residual_attention_block.1} parent=0
    #allocation2 [shape = 'u8[98304]{0}', space=vmem, size = 0x18000, scoped, tag = 'input window, operand 3, single buffered']
    #allocation3 [shape = 's32[1]{0}', space=sflag, size = 0x4, scoped, tag = 'scoped memory for residual_attention_block.1']
    #allocation4 [shape = 'u8[512]{0}', space=vmem, size = 0x400, scoped, tag = 'input window, operand 6, single buffered']
    #allocation5 [shape = 's32[1]{0}', space=sflag, size = 0x4, scoped, tag = 'scoped memory for residual_attention_block.1']
    #allocation6 [shape = 'u8[512]{0}', space=vmem, size = 0x400, scoped, tag = 'input window, operand 7, single buffered']
    #allocation7 [shape = 'u8[512]{0}', space=vmem, size = 0x400, scoped, tag = 'input window, operand 8, single buffered']
    #allocation8 [shape = 's32[1]{0}', space=sflag, size = 0x4, scoped, tag = 'scoped memory for residual_attention_block.1']
    #allocation9 [shape = 'u8[131072]{0}', space=vmem, size = 0x20000, scoped, tag = 'input window, operand 9, single buffered']
    #allocation10 [shape = 'u8[131072]{0}', space=vmem, size = 0x20000, scoped, tag = 'input window, operand 11, single buffered']
    #allocation11 [shape = 's32[1]{0}', space=sflag, size = 0x4, scoped, tag = 'scoped memory for residual_attention_block.1']
    #allocation12 [shape = 'u8[512]{0}', space=vmem, size = 0x400, scoped, tag = 'input window, operand 12, single buffered']
    %18 = vsyncpa [#allocation3], 0
    %19 = vsyncpa [#allocation5], 0
    %20 = vsyncpa [#allocation8], 0
    %21 = vsyncpa [#allocation11], 0
    // Predicated region
    $region2: #{residual_attention_block.1} parent=1 // pred_check
      _
    $region3: #{residual_attention_block.1} parent=1 // pred_check_branch
      %23 = sbr.rel (0) target = $region5
    $region4: #{residual_attention_block.1} parent=1 // pred_region
      _
    $region5: #{residual_attention_block.1} parent=1 // pred_fallthru
      _
    // Predicated region
    $region6: #{residual_attention_block.1} parent=1 // pred_check
      _
    $region7: #{residual_attention_block.1} parent=1 // pred_check_branch
      %25 = sbr.rel (0) target = $region9
    $region8: #{residual_attention_block.1} parent=1 // pred_region
      _
    $region9: #{residual_attention_block.1} parent=1 // pred_fallthru
      _
    // Predicated region
    $region10: #{residual_attention_block.1} parent=1 // pred_check
      _
    $region11: #{residual_attention_block.1} parent=1 // pred_check_branch
      %27 = sbr.rel (0) target = $region13
    $region12: #{residual_attention_block.1} parent=1 // pred_region
      _
    $region13: #{residual_attention_block.1} parent=1 // pred_fallthru
      _
    // Predicated region
    $region14: #{residual_attention_block.1} parent=1 // pred_check
      _
    $region15: #{residual_attention_block.1} parent=1 // pred_check_branch
      %29 = sbr.rel (0) target = $region17
    $region16: #{residual_attention_block.1} parent=1 // pred_region
      %s31 = ssub.s32 3072, 3072
      %32 = vsyncadd [#allocation3], %s31
      %s33 = sshll.u32 [#allocation2], 4
      %s34 = int_to_ptr.vmem [resolvable:$true] %s33
      %39 = dma.hbm_to_vmem [thread:$0]  %s3, 3072, %s34, [#allocation3], 192, 192, 12
    $region17: #{residual_attention_block.1} parent=1 // pred_fallthru
      _
    // Predicated region
    $region18: #{residual_attention_block.1} parent=1 // pred_check
      _
    $region19: #{residual_attention_block.1} parent=1 // pred_check_branch
      %41 = sbr.rel (0) target = $region21
    $region20: #{residual_attention_block.1} parent=1 // pred_region
      _
    $region21: #{residual_attention_block.1} parent=1 // pred_fallthru
      _
    // Predicated region
    $region22: #{residual_attention_block.1} parent=1 // pred_check
      _
    $region23: #{residual_attention_block.1} parent=1 // pred_check_branch
      %43 = sbr.rel (0) target = $region25
    $region24: #{residual_attention_block.1} parent=1 // pred_region
      _
    $region25: #{residual_attention_block.1} parent=1 // pred_fallthru
      _
    // Predicated region
    $region26: #{residual_attention_block.1} parent=1 // pred_check
      _
    $region27: #{residual_attention_block.1} parent=1 // pred_check_branch
      %45 = sbr.rel (0) target = $region29
    $region28: #{residual_attention_block.1} parent=1 // pred_region
      %s47 = ssub.s32 16, 16
      %48 = vsyncadd [#allocation5], %s47
      %s50 = sshll.u32 [#allocation4], 4
      %s51 = int_to_ptr.vmem [resolvable:$true] %s50
      %53 = dma.hbm_to_vmem [thread:$0]  %s6, 16, %s51, [#allocation5]
    $region29: #{residual_attention_block.1} parent=1 // pred_fallthru
      _
    // Predicated region
    $region30: #{residual_attention_block.1} parent=1 // pred_check
      _
    $region31: #{residual_attention_block.1} parent=1 // pred_check_branch
      %55 = sbr.rel (0) target = $region33
    $region32: #{residual_attention_block.1} parent=1 // pred_region
      %s57 = ssub.s32 16, 16
      %58 = vsyncadd [#allocation5], %s57
      %s60 = sshll.u32 [#allocation6], 4
      %s61 = int_to_ptr.vmem [resolvable:$true] %s60
      %63 = dma.hbm_to_vmem [thread:$0]  %s7, 16, %s61, [#allocation5]
    $region33: #{residual_attention_block.1} parent=1 // pred_fallthru
      _
    // Predicated region
    $region34: #{residual_attention_block.1} parent=1 // pred_check
      _
    $region35: #{residual_attention_block.1} parent=1 // pred_check_branch
      %65 = sbr.rel (0) target = $region37
    $region36: #{residual_attention_block.1} parent=1 // pred_region
      %s67 = ssub.s32 16, 16
      %68 = vsyncadd [#allocation8], %s67
      %s70 = sshll.u32 [#allocation7], 4
      %s71 = int_to_ptr.vmem [resolvable:$true] %s70
      %73 = dma.hbm_to_vmem [thread:$0]  %s8, 16, %s71, [#allocation8]
    $region37: #{residual_attention_block.1} parent=1 // pred_fallthru
      _
    // Predicated region
    $region38: #{residual_attention_block.1} parent=1 // pred_check
      _
    $region39: #{residual_attention_block.1} parent=1 // pred_check_branch
      %75 = sbr.rel (0) target = $region41
    $region40: #{residual_attention_block.1} parent=1 // pred_region
      %s77 = ssub.s32 4096, 4096
      %78 = vsyncadd [#allocation8], %s77
      %s79 = sshll.u32 [#allocation9], 4
      %s80 = int_to_ptr.vmem [resolvable:$true] %s79
      %85 = dma.hbm_to_vmem [thread:$0]  %s9, 4096, %s80, [#allocation8], 256, 256, 16
    $region41: #{residual_attention_block.1} parent=1 // pred_fallthru
      _
    // Predicated region
    $region42: #{residual_attention_block.1} parent=1 // pred_check
      _
    $region43: #{residual_attention_block.1} parent=1 // pred_check_branch
      %87 = sbr.rel (0) target = $region45
    $region44: #{residual_attention_block.1} parent=1 // pred_region
      _
    $region45: #{residual_attention_block.1} parent=1 // pred_fallthru
      _
    // Predicated region
    $region46: #{residual_attention_block.1} parent=1 // pred_check
      _
    $region47: #{residual_attention_block.1} parent=1 // pred_check_branch
      %89 = sbr.rel (0) target = $region49
    $region48: #{residual_attention_block.1} parent=1 // pred_region
      %s91 = ssub.s32 4096, 4096
      %92 = vsyncadd [#allocation11], %s91
      %s93 = sshll.u32 [#allocation10], 4
      %s94 = int_to_ptr.vmem [resolvable:$true] %s93
      %99 = dma.hbm_to_vmem [thread:$0]  %s11, 4096, %s94, [#allocation11], 64, 64, 4
    $region49: #{residual_attention_block.1} parent=1 // pred_fallthru
      _
    // Predicated region
    $region50: #{residual_attention_block.1} parent=1 // pred_check
      _
    $region51: #{residual_attention_block.1} parent=1 // pred_check_branch
      %101 = sbr.rel (0) target = $region53
    $region52: #{residual_attention_block.1} parent=1 // pred_region
      %s103 = ssub.s32 16, 16
      %104 = vsyncadd [#allocation11], %s103
      %s106 = sshll.u32 [#allocation12], 4
      %s107 = int_to_ptr.vmem [resolvable:$true] %s106
      %109 = dma.hbm_to_vmem [thread:$0]  %s12, 16, %s107, [#allocation11]
    $region53: #{residual_attention_block.1} parent=1 // pred_fallthru
      _
    // Predicated region
    $region54: #{residual_attention_block.1} parent=1 // pred_check
      _
    $region55: #{residual_attention_block.1} parent=1 // pred_check_branch
      %111 = sbr.rel (0) target = $region57
    $region56: #{residual_attention_block.1} parent=1 // pred_region
      %112 = dma.done [#allocation3], 3072
    $region57: #{residual_attention_block.1} parent=1 // pred_fallthru
      _
    // Predicated region
    $region58: #{residual_attention_block.1} parent=1 // pred_check
      _
    $region59: #{residual_attention_block.1} parent=1 // pred_check_branch
      %114 = sbr.rel (0) target = $region61
    $region60: #{residual_attention_block.1} parent=1 // pred_region
      %115 = dma.done [#allocation5], 16
    $region61: #{residual_attention_block.1} parent=1 // pred_fallthru
      _
    // Predicated region
    $region62: #{residual_attention_block.1} parent=1 // pred_check
      _
    $region63: #{residual_attention_block.1} parent=1 // pred_check_branch
      %117 = sbr.rel (0) target = $region65
    $region64: #{residual_attention_block.1} parent=1 // pred_region
      %118 = dma.done [#allocation5], 16
    $region65: #{residual_attention_block.1} parent=1 // pred_fallthru
      _
    // Predicated region
    $region66: #{residual_attention_block.1} parent=1 // pred_check
      _
    $region67: #{residual_attention_block.1} parent=1 // pred_check_branch
      %120 = sbr.rel (0) target = $region69
    $region68: #{residual_attention_block.1} parent=1 // pred_region
      %121 = dma.done [#allocation8], 16
    $region69: #{residual_attention_block.1} parent=1 // pred_fallthru
      _
    // Predicated region
    $region70: #{residual_attention_block.1} parent=1 // pred_check
      _
    $region71: #{residual_attention_block.1} parent=1 // pred_check_branch
      %123 = sbr.rel (0) target = $region73
    $region72: #{residual_attention_block.1} parent=1 // pred_region
      %124 = dma.done [#allocation8], 4096
    $region73: #{residual_attention_block.1} parent=1 // pred_fallthru
      _
    // Predicated region
    $region74: #{residual_attention_block.1} parent=1 // pred_check
      _
    $region75: #{residual_attention_block.1} parent=1 // pred_check_branch
      %126 = sbr.rel (0) target = $region77
    $region76: #{residual_attention_block.1} parent=1 // pred_region
      %127 = dma.done [#allocation11], 4096
    $region77: #{residual_attention_block.1} parent=1 // pred_fallthru
      _
    // Predicated region
    $region78: #{residual_attention_block.1} parent=1 // pred_check
      _
    $region79: #{residual_attention_block.1} parent=1 // pred_check_branch
      %129 = sbr.rel (0) target = $region81
    $region80: #{residual_attention_block.1} parent=1 // pred_region
      %130 = dma.done [#allocation11], 16
    $region81: #{residual_attention_block.1} parent=1 // pred_fallthru
      _
    %v132 = vld [vmem:[%s0] sm:$0xff]
    %v133 = vld [vmem:[%s0 + $0x8] sm:$0xff]
    %v134 = vld [vmem:[%s0 + $0x10] sm:$0xff]
    %v135 = vld [vmem:[%s0 + $0x18] sm:$0xff]
    %v136 = vld [vmem:[%s1] sm:$0x1]
    %v137 = vld [vmem:[%s2] sm:$0x1]
    %138 = vadd.xlane.f32.xlu0 %v132
    %v139 = vpop.xlane.xlu0 %138
    %140 = vadd.xlane.f32.xlu0 %v133
    %v141 = vpop.xlane.xlu0 %140
    %142 = vadd.xlane.f32.xlu0 %v134
    %v143 = vpop.xlane.xlu0 %142
    %144 = vadd.xlane.f32.xlu0 %v135
    %v145 = vpop.xlane.xlu0 %144
    %v146 = vrcp.pop 128.0
    %v147 = vmul.f32 %v139, %v146
    %v148 = vmul.f32 %v141, %v146
    %v149 = vmul.f32 %v143, %v146
    %v150 = vmul.f32 %v145, %v146
    %v151 = vsub.f32 %v132, %v147
    %v152 = vsub.f32 %v133, %v148
    %v153 = vsub.f32 %v134, %v149
    %v154 = vsub.f32 %v135, %v150
    %v155 = vmul.f32 %v151, %v151
    %v156 = vmul.f32 %v152, %v152
    %v157 = vmul.f32 %v153, %v153
    %v158 = vmul.f32 %v154, %v154
    %159 = vadd.xlane.f32.xlu0 %v155
    %v160 = vpop.xlane.xlu0 %159
    %161 = vadd.xlane.f32.xlu0 %v156
    %v162 = vpop.xlane.xlu0 %161
    %163 = vadd.xlane.f32.xlu0 %v157
    %v164 = vpop.xlane.xlu0 %163
    %165 = vadd.xlane.f32.xlu0 %v158
    %v166 = vpop.xlane.xlu0 %165
    %v167 = vmul.f32 %v160, %v146
    %v168 = vmul.f32 %v162, %v146
    %v169 = vmul.f32 %v164, %v146
    %v170 = vmul.f32 %v166, %v146
    %v171 = vadd.f32 %v167, 1e-05
    %v172 = vadd.f32 %v168, 1e-05
    %v173 = vadd.f32 %v169, 1e-05
    %v174 = vadd.f32 %v170, 1e-05
    %v175 = vrsqrt.pop %v171
    %v176 = vrsqrt.pop %v172
    %v177 = vrsqrt.pop %v173
    %v178 = vrsqrt.pop %v174
    %v179 = vmul.f32 %v151, %v175
    %v180 = vmul.f32 %v152, %v176
    %v181 = vmul.f32 %v153, %v177
    %v182 = vmul.f32 %v154, %v178
    %v184 = vlaneseq
    %v185 = vshrl.u32 %v184, 7
    %v186 = vsub.s32 0, %v185
    %v187 = vrot.slane %v136, %v186
    %v189 = vmul.f32 %v179, %v187
    %v190 = vmul.f32 %v180, %v187
    %v191 = vmul.f32 %v181, %v187
    %v192 = vmul.f32 %v182, %v187
    %v194 = vlaneseq
    %v195 = vshrl.u32 %v194, 7
    %v196 = vsub.s32 0, %v195
    %v197 = vrot.slane %v137, %v196
    %v199 = vadd.f32 %v189, %v197
    %v200 = vadd.f32 %v190, %v197
    %v201 = vadd.f32 %v191, %v197
    %v202 = vadd.f32 %v192, %v197
    %v203 = vpack.c.bf16 %v200, %v199
    %v204 = vpack.c.bf16 %v202, %v201
    %v205 = vld [vmem:[#allocation2] sm:$0xff]
    %v206 = vld [vmem:[#allocation2 + $0x8] sm:$0xf]
    %v207 = vld [vmem:[#allocation2 + $0xc] sm:$0xff]
    %v208 = vld [vmem:[#allocation2 + $0x14] sm:$0xf]
    %v209 = vld [vmem:[#allocation2 + $0x18] sm:$0xff]
    %v210 = vld [vmem:[#allocation2 + $0x20] sm:$0xf]
    %v211 = vld [vmem:[#allocation2 + $0x24] sm:$0xff]
    %v212 = vld [vmem:[#allocation2 + $0x2c] sm:$0xf]
    %v213 = vld [vmem:[#allocation2 + $0x30] sm:$0xff]
    %v214 = vld [vmem:[#allocation2 + $0x38] sm:$0xf]
    %v215 = vld [vmem:[#allocation2 + $0x3c] sm:$0xff]
    %v216 = vld [vmem:[#allocation2 + $0x44] sm:$0xf]
    %v217 = vld [vmem:[#allocation2 + $0x48] sm:$0xff]
    %v218 = vld [vmem:[#allocation2 + $0x50] sm:$0xf]
    %v219 = vld [vmem:[#allocation2 + $0x54] sm:$0xff]
    %v220 = vld [vmem:[#allocation2 + $0x5c] sm:$0xf]
    %v221 = vld [vmem:[#allocation2 + $0x60] sm:$0xff]
    %v222 = vld [vmem:[#allocation2 + $0x68] sm:$0xf]
    %v223 = vld [vmem:[#allocation2 + $0x6c] sm:$0xff]
    %v224 = vld [vmem:[#allocation2 + $0x74] sm:$0xf]
    %v225 = vld [vmem:[#allocation2 + $0x78] sm:$0xff]
    %v226 = vld [vmem:[#allocation2 + $0x80] sm:$0xf]
    %v227 = vld [vmem:[#allocation2 + $0x84] sm:$0xff]
    %v228 = vld [vmem:[#allocation2 + $0x8c] sm:$0xf]
    %v229 = vld [vmem:[#allocation2 + $0x90] sm:$0xff]
    %v230 = vld [vmem:[#allocation2 + $0x98] sm:$0xf]
    %v231 = vld [vmem:[#allocation2 + $0x9c] sm:$0xff]
    %v232 = vld [vmem:[#allocation2 + $0xa4] sm:$0xf]
    %v233 = vld [vmem:[#allocation2 + $0xa8] sm:$0xff]
    %v234 = vld [vmem:[#allocation2 + $0xb0] sm:$0xf]
    %v235 = vld [vmem:[#allocation2 + $0xb4] sm:$0xff]
    %v236 = vld [vmem:[#allocation2 + $0xbc] sm:$0xf]
    %v237 = vld [vmem:[%s4] sm:$0x7]
    %v239 = vlaneseq
    %v240 = vshrl.u32 %v239, 7
    %v241 = vsub.s32 0, %v240
    %v242 = vrot.slane %v237, %v241
    %v243 = vlaneseq
    %v244 = vshrl.u32 %v243, 7
    %v245 = vsub.s32 1, %v244
    %v246 = vrot.slane %v237, %v245
    %v247 = vlaneseq
    %v248 = vshrl.u32 %v247, 7
    %v249 = vsub.s32 2, %v248
    %v250 = vrot.slane %v237, %v249
    %v286 = vunpack.c.l.b16 %v205
    %v287 = vunpack.c.h.b16 %v205
    %v288 = vunpack.c.l.b16 %v206
    %v289 = vunpack.c.l.b16 %v207
    %v290 = vunpack.c.h.b16 %v207
    %v291 = vunpack.c.l.b16 %v208
    %v292 = vunpack.c.l.b16 %v209
    %v293 = vunpack.c.h.b16 %v209
    %v294 = vunpack.c.l.b16 %v210
    %v295 = vunpack.c.l.b16 %v211
    %v296 = vunpack.c.h.b16 %v211
    %v297 = vunpack.c.l.b16 %v212
    %v298 = vunpack.c.l.b16 %v213
    %v299 = vunpack.c.h.b16 %v213
    %v300 = vunpack.c.l.b16 %v214
    %v301 = vunpack.c.l.b16 %v215
    %v302 = vunpack.c.h.b16 %v215
    %v303 = vunpack.c.l.b16 %v216
    %v304 = vunpack.c.l.b16 %v217
    %v305 = vunpack.c.h.b16 %v217
    %v306 = vunpack.c.l.b16 %v218
    %v307 = vunpack.c.l.b16 %v219
    %v308 = vunpack.c.h.b16 %v219
    %v309 = vunpack.c.l.b16 %v220
    %v310 = vunpack.c.l.b16 %v221
    %v311 = vunpack.c.h.b16 %v221
    %v312 = vunpack.c.l.b16 %v222
    %v313 = vunpack.c.l.b16 %v223
    %v314 = vunpack.c.h.b16 %v223
    %v315 = vunpack.c.l.b16 %v224
    %v316 = vunpack.c.l.b16 %v225
    %v317 = vunpack.c.h.b16 %v225
    %v318 = vunpack.c.l.b16 %v226
    %v319 = vunpack.c.l.b16 %v227
    %v320 = vunpack.c.h.b16 %v227
    %v321 = vunpack.c.l.b16 %v228
    %v322 = vunpack.c.l.b16 %v229
    %v323 = vunpack.c.h.b16 %v229
    %v324 = vunpack.c.l.b16 %v230
    %v325 = vunpack.c.l.b16 %v231
    %v326 = vunpack.c.h.b16 %v231
    %v327 = vunpack.c.l.b16 %v232
    %v328 = vunpack.c.l.b16 %v233
    %v329 = vunpack.c.h.b16 %v233
    %v330 = vunpack.c.l.b16 %v234
    %v331 = vunpack.c.l.b16 %v235
    %v332 = vunpack.c.h.b16 %v235
    %v333 = vunpack.c.l.b16 %v236
    %v334 = vpack.c.b16 %v289, %v286
    %v335 = vpack.c.b16 %v290, %v287
    %v336 = vpack.c.b16 %v291, %v288
    %v337 = vpack.c.b16 %v295, %v292
    %v338 = vpack.c.b16 %v296, %v293
    %v339 = vpack.c.b16 %v297, %v294
    %v340 = vpack.c.b16 %v301, %v298
    %v341 = vpack.c.b16 %v302, %v299
    %v342 = vpack.c.b16 %v303, %v300
    %v343 = vpack.c.b16 %v307, %v304
    %v344 = vpack.c.b16 %v308, %v305
    %v345 = vpack.c.b16 %v309, %v306
    %v346 = vpack.c.b16 %v313, %v310
    %v347 = vpack.c.b16 %v314, %v311
    %v348 = vpack.c.b16 %v315, %v312
    %v349 = vpack.c.b16 %v319, %v316
    %v350 = vpack.c.b16 %v320, %v317
    %v351 = vpack.c.b16 %v321, %v318
    %v352 = vpack.c.b16 %v325, %v322
    %v353 = vpack.c.b16 %v326, %v323
    %v354 = vpack.c.b16 %v327, %v324
    %v355 = vpack.c.b16 %v331, %v328
    %v356 = vpack.c.b16 %v332, %v329
    %v357 = vpack.c.b16 %v333, %v330
    %382 = vmatprep.subr.bf16.mxu0 %v335
    %383 = vmatpush1.bf16.msra.mxu0 %v334
    %384 = vmatprep.subr.bf16.mxu0 %v338
    %385 = vmatpush1.bf16.msra.mxu0 %v337
    %386 = vmatprep.subr.bf16.mxu0 %v341
    %387 = vmatpush1.bf16.msra.mxu0 %v340
    %388 = vmatprep.subr.bf16.mxu0 %v344
    %389 = vmatpush1.bf16.msra.mxu0 %v343
    %390 = vmatprep.subr.bf16.mxu0 %v347
    %391 = vmatpush1.bf16.msra.mxu0 %v346
    %392 = vmatprep.subr.bf16.mxu0 %v350
    %393 = vmatpush1.bf16.msra.mxu0 %v349
    %394 = vmatprep.subr.bf16.mxu0 %v353
    %395 = vmatpush1.bf16.msra.mxu0 %v352
    %396 = vmatprep.subr.bf16.mxu0 %v356
    %397 = vmatpush1.bf16.msra.mxu0 %v355
    %398 = vmatprep.subr.bf16.mxu0 0
    %399 = vmatpush1.bf16.msra.mxu0 0
    %400 = vmatprep.subr.bf16.mxu0 0
    %401 = vmatpush1.bf16.msra.mxu0 0
    %402 = vmatprep.subr.bf16.mxu0 0
    %403 = vmatpush1.bf16.msra.mxu0 0
    %404 = vmatprep.subr.bf16.mxu0 0
    %405 = vmatpush1.bf16.msra.mxu0 0
    %406 = vmatprep.subr.bf16.mxu0 0
    %407 = vmatpush1.bf16.msra.mxu0 0
    %408 = vmatprep.subr.bf16.mxu0 0
    %409 = vmatpush1.bf16.msra.mxu0 0
    %410 = vmatprep.subr.bf16.mxu0 0
    %411 = vmatpush1.bf16.msra.mxu0 0
    %412 = vmatprep.subr.bf16.mxu0 0
    %413 = vmatpush1.bf16.msra.mxu0 0
    %414 = vmatprep.mubr.bf16.mxu0 0
    %415 = vmatmul.mubr.bf16.gmra.mrb[0].mxu0 %v203
    %v416 = vpop.f32.mrb[0].mxu0
    %v417 = vadd.f32 %v242, %v416
    %v418 = vpop.f32.mrb[0].mxu0
    %v419 = vadd.f32 %v246, %v418
    %v420 = vpop.f32.mrb[0].mxu0
    %v421 = vadd.f32 %v242, %v420
    %v422 = vpop.f32.mrb[0].mxu0
    %v423 = vadd.f32 %v246, %v422
    %424 = vmatprep.mubr.bf16.mxu0 0
    %425 = vmatmul.mubr.bf16.gmra.mrb[0].mxu0 %v204
    %v426 = vpop.f32.mrb[0].mxu0
    %v427 = vadd.f32 %v242, %v426
    %v428 = vpop.f32.mrb[0].mxu0
    %v429 = vadd.f32 %v246, %v428
    %v430 = vpop.f32.mrb[0].mxu0
    %v431 = vadd.f32 %v242, %v430
    %v432 = vpop.f32.mrb[0].mxu0
    %v433 = vadd.f32 %v246, %v432
    %434 = vdwg.mxu0
    %435 = vmatprep.subr.bf16.mxu0 0
    %436 = vmatpush1.bf16.msra.mxu0 %v336
    %437 = vmatprep.subr.bf16.mxu0 0
    %438 = vmatpush1.bf16.msra.mxu0 %v339
    %439 = vmatprep.subr.bf16.mxu0 0
    %440 = vmatpush1.bf16.msra.mxu0 %v342
    %441 = vmatprep.subr.bf16.mxu0 0
    %442 = vmatpush1.bf16.msra.mxu0 %v345
    %443 = vmatprep.subr.bf16.mxu0 0
    %444 = vmatpush1.bf16.msra.mxu0 %v348
    %445 = vmatprep.subr.bf16.mxu0 0
    %446 = vmatpush1.bf16.msra.mxu0 %v351
    %447 = vmatprep.subr.bf16.mxu0 0
    %448 = vmatpush1.bf16.msra.mxu0 %v354
    %449 = vmatprep.subr.bf16.mxu0 0
    %450 = vmatpush1.bf16.msra.mxu0 %v357
    %451 = vmatprep.subr.bf16.mxu0 0
    %452 = vmatpush1.bf16.msra.mxu0 0
    %453 = vmatprep.subr.bf16.mxu0 0
    %454 = vmatpush1.bf16.msra.mxu0 0
    %455 = vmatprep.subr.bf16.mxu0 0
    %456 = vmatpush1.bf16.msra.mxu0 0
    %457 = vmatprep.subr.bf16.mxu0 0
    %458 = vmatpush1.bf16.msra.mxu0 0
    %459 = vmatprep.subr.bf16.mxu0 0
    %460 = vmatpush1.bf16.msra.mxu0 0
    %461 = vmatprep.subr.bf16.mxu0 0
    %462 = vmatpush1.bf16.msra.mxu0 0
    %463 = vmatprep.subr.bf16.mxu0 0
    %464 = vmatpush1.bf16.msra.mxu0 0
    %465 = vmatprep.subr.bf16.mxu0 0
    %466 = vmatpush1.bf16.msra.mxu0 0
    %467 = vmatprep.mubr.bf16.mxu0 0
    %468 = vmatmul.mubr.bf16.gmra.mrb[0].mxu0 %v203
    %v469 = vpop.f32.mrb[0].mxu0
    %v470 = vadd.f32 %v250, %v469
    %v471 = vpop.f32.mrb[0].mxu0
    %v472 = vpop.f32.mrb[0].mxu0
    %v473 = vadd.f32 %v250, %v472
    %v474 = vpop.f32.mrb[0].mxu0
    %475 = vmatprep.mubr.bf16.mxu0 0
    %476 = vmatmul.mubr.bf16.gmra.mrb[0].mxu0 %v204
    %v477 = vpop.f32.mrb[0].mxu0
    %v478 = vadd.f32 %v250, %v477
    %v479 = vpop.f32.mrb[0].mxu0
    %v480 = vpop.f32.mrb[0].mxu0
    %v481 = vadd.f32 %v250, %v480
    %v482 = vpop.f32.mrb[0].mxu0
    %483 = vdwg.mxu0
    %v484 = vpack.c.bf16 %v421, %v417
    %v485 = vpack.c.bf16 %v431, %v427
    %v486 = vpack.c.bf16 %v423, %v419
    %v487 = vpack.c.bf16 %v433, %v429
    %v488 = vpack.c.bf16 %v473, %v470
    %v489 = vpack.c.bf16 %v481, %v478
    %492 = vrot.lane.b32.xlu0 %v484, 96
    %v493 = vpop.permute.xlu0 %492
    %494 = vrot.lane.b32.xlu0 %v485, 96
    %v495 = vpop.permute.xlu0 %494
    %496 = vrot.lane.b32.xlu0 %v484, 64
    %v497 = vpop.permute.xlu0 %496
    %498 = vrot.lane.b32.xlu0 %v485, 64
    %v499 = vpop.permute.xlu0 %498
    %500 = vrot.lane.b32.xlu0 %v484, 32
    %v501 = vpop.permute.xlu0 %500
    %502 = vrot.lane.b32.xlu0 %v485, 32
    %v503 = vpop.permute.xlu0 %502
    %506 = vrot.lane.b32.xlu0 %v486, 96
    %v507 = vpop.permute.xlu0 %506
    %508 = vrot.lane.b32.xlu0 %v487, 96
    %v509 = vpop.permute.xlu0 %508
    %510 = vrot.lane.b32.xlu0 %v486, 64
    %v511 = vpop.permute.xlu0 %510
    %512 = vrot.lane.b32.xlu0 %v487, 64
    %v513 = vpop.permute.xlu0 %512
    %514 = vrot.lane.b32.xlu0 %v486, 32
    %v515 = vpop.permute.xlu0 %514
    %516 = vrot.lane.b32.xlu0 %v487, 32
    %v517 = vpop.permute.xlu0 %516
    %520 = vrot.lane.b32.xlu0 %v488, 96
    %v521 = vpop.permute.xlu0 %520
    %522 = vrot.lane.b32.xlu0 %v489, 96
    %v523 = vpop.permute.xlu0 %522
    %526 = vrot.lane.b32.xlu0 %v488, 64
    %v527 = vpop.permute.xlu0 %526
    %528 = vrot.lane.b32.xlu0 %v489, 64
    %v529 = vpop.permute.xlu0 %528
    %532 = vrot.lane.b32.xlu0 %v488, 32
    %v533 = vpop.permute.xlu0 %532
    %534 = vrot.lane.b32.xlu0 %v489, 32
    %v535 = vpop.permute.xlu0 %534
    %vm538 = vcmask 261120
    %v540 = vsel %vm538, %v484, 0
    %v543 = vsel %vm538, %v486, 0
    %545 = vmatprep.subr.bf16.mxu0 0
    %546 = vmatpush1.bf16.xpose.msra.mxu0 %v543
    %547 = vmatprep.subr.bf16.mxu0 0
    %548 = vmatpush1.bf16.xpose.msra.mxu0 0
    %549 = vmatprep.subr.bf16.mxu0 0
    %550 = vmatpush1.bf16.xpose.msra.mxu0 0
    %551 = vmatprep.subr.bf16.mxu0 0
    %552 = vmatpush1.bf16.xpose.msra.mxu0 0
    %553 = vmatprep.subr.bf16.mxu0 0
    %554 = vmatpush1.bf16.xpose.msra.mxu0 0
    %555 = vmatprep.subr.bf16.mxu0 0
    %556 = vmatpush1.bf16.xpose.msra.mxu0 0
    %557 = vmatprep.subr.bf16.mxu0 0
    %558 = vmatpush1.bf16.xpose.msra.mxu0 0
    %559 = vmatprep.subr.bf16.mxu0 0
    %560 = vmatpush1.bf16.xpose.msra.mxu0 0
    %561 = vmatprep.subr.bf16.mxu0 0
    %562 = vmatpush1.bf16.xpose.msra.mxu0 0
    %563 = vmatprep.subr.bf16.mxu0 0
    %564 = vmatpush1.bf16.xpose.msra.mxu0 0
    %565 = vmatprep.subr.bf16.mxu0 0
    %566 = vmatpush1.bf16.xpose.msra.mxu0 0
    %567 = vmatprep.subr.bf16.mxu0 0
    %568 = vmatpush1.bf16.xpose.msra.mxu0 0
    %569 = vmatprep.subr.bf16.mxu0 0
    %570 = vmatpush1.bf16.xpose.msra.mxu0 0
    %571 = vmatprep.subr.bf16.mxu0 0
    %572 = vmatpush1.bf16.xpose.msra.mxu0 0
    %573 = vmatprep.subr.bf16.mxu0 0
    %574 = vmatpush1.bf16.xpose.msra.mxu0 0
    %575 = vmatprep.subr.bf16.mxu0 0
    %576 = vmatpush1.bf16.xpose.msra.mxu0 0
    %577 = vmatprep.mubr.bf16.mxu0 0
    %578 = vmatmul.mubr.bf16.gmra.mrb[0].mxu0 %v540
    %v579 = vpop.f32.mrb[0].mxu0
    %v580 = vadd.f32 0.0, %v579
    %v581 = vpop.f32.mrb[0].mxu0
    %v582 = vpop.f32.mrb[0].mxu0
    %v583 = vadd.f32 0.0, %v582
    %v584 = vpop.f32.mrb[0].mxu0
    %585 = vdwg.mxu0
    %v587 = vsel %vm538, %v485, 0
    %v590 = vsel %vm538, %v487, 0
    %592 = vmatprep.subr.bf16.mxu0 0
    %593 = vmatpush1.bf16.xpose.msra.mxu0 %v590
    %594 = vmatprep.subr.bf16.mxu0 0
    %595 = vmatpush1.bf16.xpose.msra.mxu0 0
    %596 = vmatprep.subr.bf16.mxu0 0
    %597 = vmatpush1.bf16.xpose.msra.mxu0 0
    %598 = vmatprep.subr.bf16.mxu0 0
    %599 = vmatpush1.bf16.xpose.msra.mxu0 0
    %600 = vmatprep.subr.bf16.mxu0 0
    %601 = vmatpush1.bf16.xpose.msra.mxu0 0
    %602 = vmatprep.subr.bf16.mxu0 0
    %603 = vmatpush1.bf16.xpose.msra.mxu0 0
    %604 = vmatprep.subr.bf16.mxu0 0
    %605 = vmatpush1.bf16.xpose.msra.mxu0 0
    %606 = vmatprep.subr.bf16.mxu0 0
    %607 = vmatpush1.bf16.xpose.msra.mxu0 0
    %608 = vmatprep.subr.bf16.mxu0 0
    %609 = vmatpush1.bf16.xpose.msra.mxu0 0
    %610 = vmatprep.subr.bf16.mxu0 0
    %611 = vmatpush1.bf16.xpose.msra.mxu0 0
    %612 = vmatprep.subr.bf16.mxu0 0
    %613 = vmatpush1.bf16.xpose.msra.mxu0 0
    %614 = vmatprep.subr.bf16.mxu0 0
    %615 = vmatpush1.bf16.xpose.msra.mxu0 0
    %616 = vmatprep.subr.bf16.mxu0 0
    %617 = vmatpush1.bf16.xpose.msra.mxu0 0
    %618 = vmatprep.subr.bf16.mxu0 0
    %619 = vmatpush1.bf16.xpose.msra.mxu0 0
    %620 = vmatprep.subr.bf16.mxu0 0
    %621 = vmatpush1.bf16.xpose.msra.mxu0 0
    %622 = vmatprep.subr.bf16.mxu0 0
    %623 = vmatpush1.bf16.xpose.msra.mxu0 0
    %624 = vmatprep.mubr.bf16.mxu0 0
    %625 = vmatmul.mubr.bf16.gmra.mrb[0].mxu0 %v587
    %v626 = vpop.f32.mrb[0].mxu0
    %v627 = vadd.f32 0.0, %v626
    %v628 = vpop.f32.mrb[0].mxu0
    %v629 = vpop.f32.mrb[0].mxu0
    %v630 = vadd.f32 0.0, %v629
    %v631 = vpop.f32.mrb[0].mxu0
    %632 = vdwg.mxu0
    %v634 = vsel %vm538, %v493, 0
    %v637 = vsel %vm538, %v507, 0
    %639 = vmatprep.subr.bf16.mxu0 0
    %640 = vmatpush1.bf16.xpose.msra.mxu0 %v637
    %641 = vmatprep.subr.bf16.mxu0 0
    %642 = vmatpush1.bf16.xpose.msra.mxu0 0
    %643 = vmatprep.subr.bf16.mxu0 0
    %644 = vmatpush1.bf16.xpose.msra.mxu0 0
    %645 = vmatprep.subr.bf16.mxu0 0
    %646 = vmatpush1.bf16.xpose.msra.mxu0 0
    %647 = vmatprep.subr.bf16.mxu0 0
    %648 = vmatpush1.bf16.xpose.msra.mxu0 0
    %649 = vmatprep.subr.bf16.mxu0 0
    %650 = vmatpush1.bf16.xpose.msra.mxu0 0
    %651 = vmatprep.subr.bf16.mxu0 0
    %652 = vmatpush1.bf16.xpose.msra.mxu0 0
    %653 = vmatprep.subr.bf16.mxu0 0
    %654 = vmatpush1.bf16.xpose.msra.mxu0 0
    %655 = vmatprep.subr.bf16.mxu0 0
    %656 = vmatpush1.bf16.xpose.msra.mxu0 0
    %657 = vmatprep.subr.bf16.mxu0 0
    %658 = vmatpush1.bf16.xpose.msra.mxu0 0
    %659 = vmatprep.subr.bf16.mxu0 0
    %660 = vmatpush1.bf16.xpose.msra.mxu0 0
    %661 = vmatprep.subr.bf16.mxu0 0
    %662 = vmatpush1.bf16.xpose.msra.mxu0 0
    %663 = vmatprep.subr.bf16.mxu0 0
    %664 = vmatpush1.bf16.xpose.msra.mxu0 0
    %665 = vmatprep.subr.bf16.mxu0 0
    %666 = vmatpush1.bf16.xpose.msra.mxu0 0
    %667 = vmatprep.subr.bf16.mxu0 0
    %668 = vmatpush1.bf16.xpose.msra.mxu0 0
    %669 = vmatprep.subr.bf16.mxu0 0
    %670 = vmatpush1.bf16.xpose.msra.mxu0 0
    %671 = vmatprep.mubr.bf16.mxu0 0
    %672 = vmatmul.mubr.bf16.gmra.mrb[0].mxu0 %v634
    %v673 = vpop.f32.mrb[0].mxu0
    %v674 = vadd.f32 0.0, %v673
    %v675 = vpop.f32.mrb[0].mxu0
    %v676 = vpop.f32.mrb[0].mxu0
    %v677 = vadd.f32 0.0, %v676
    %v678 = vpop.f32.mrb[0].mxu0
    %679 = vdwg.mxu0
    %v681 = vsel %vm538, %v495, 0
    %v684 = vsel %vm538, %v509, 0
    %686 = vmatprep.subr.bf16.mxu0 0
    %687 = vmatpush1.bf16.xpose.msra.mxu0 %v684
    %688 = vmatprep.subr.bf16.mxu0 0
    %689 = vmatpush1.bf16.xpose.msra.mxu0 0
    %690 = vmatprep.subr.bf16.mxu0 0
    %691 = vmatpush1.bf16.xpose.msra.mxu0 0
    %692 = vmatprep.subr.bf16.mxu0 0
    %693 = vmatpush1.bf16.xpose.msra.mxu0 0
    %694 = vmatprep.subr.bf16.mxu0 0
    %695 = vmatpush1.bf16.xpose.msra.mxu0 0
    %696 = vmatprep.subr.bf16.mxu0 0
    %697 = vmatpush1.bf16.xpose.msra.mxu0 0
    %698 = vmatprep.subr.bf16.mxu0 0
    %699 = vmatpush1.bf16.xpose.msra.mxu0 0
    %700 = vmatprep.subr.bf16.mxu0 0
    %701 = vmatpush1.bf16.xpose.msra.mxu0 0
    %702 = vmatprep.subr.bf16.mxu0 0
    %703 = vmatpush1.bf16.xpose.msra.mxu0 0
    %704 = vmatprep.subr.bf16.mxu0 0
    %705 = vmatpush1.bf16.xpose.msra.mxu0 0
    %706 = vmatprep.subr.bf16.mxu0 0
    %707 = vmatpush1.bf16.xpose.msra.mxu0 0
    %708 = vmatprep.subr.bf16.mxu0 0
    %709 = vmatpush1.bf16.xpose.msra.mxu0 0
    %710 = vmatprep.subr.bf16.mxu0 0
    %711 = vmatpush1.bf16.xpose.msra.mxu0 0
    %712 = vmatprep.subr.bf16.mxu0 0
    %713 = vmatpush1.bf16.xpose.msra.mxu0 0
    %714 = vmatprep.subr.bf16.mxu0 0
    %715 = vmatpush1.bf16.xpose.msra.mxu0 0
    %716 = vmatprep.subr.bf16.mxu0 0
    %717 = vmatpush1.bf16.xpose.msra.mxu0 0
    %718 = vmatprep.mubr.bf16.mxu0 0
    %719 = vmatmul.mubr.bf16.gmra.mrb[0].mxu0 %v681
    %v720 = vpop.f32.mrb[0].mxu0
    %v721 = vadd.f32 0.0, %v720
    %v722 = vpop.f32.mrb[0].mxu0
    %v723 = vpop.f32.mrb[0].mxu0
    %v724 = vadd.f32 0.0, %v723
    %v725 = vpop.f32.mrb[0].mxu0
    %726 = vdwg.mxu0
    %v728 = vsel %vm538, %v497, 0
    %v731 = vsel %vm538, %v511, 0
    %733 = vmatprep.subr.bf16.mxu0 0
    %734 = vmatpush1.bf16.xpose.msra.mxu0 %v731
    %735 = vmatprep.subr.bf16.mxu0 0
    %736 = vmatpush1.bf16.xpose.msra.mxu0 0
    %737 = vmatprep.subr.bf16.mxu0 0
    %738 = vmatpush1.bf16.xpose.msra.mxu0 0
    %739 = vmatprep.subr.bf16.mxu0 0
    %740 = vmatpush1.bf16.xpose.msra.mxu0 0
    %741 = vmatprep.subr.bf16.mxu0 0
    %742 = vmatpush1.bf16.xpose.msra.mxu0 0
    %743 = vmatprep.subr.bf16.mxu0 0
    %744 = vmatpush1.bf16.xpose.msra.mxu0 0
    %745 = vmatprep.subr.bf16.mxu0 0
    %746 = vmatpush1.bf16.xpose.msra.mxu0 0
    %747 = vmatprep.subr.bf16.mxu0 0
    %748 = vmatpush1.bf16.xpose.msra.mxu0 0
    %749 = vmatprep.subr.bf16.mxu0 0
    %750 = vmatpush1.bf16.xpose.msra.mxu0 0
    %751 = vmatprep.subr.bf16.mxu0 0
    %752 = vmatpush1.bf16.xpose.msra.mxu0 0
    %753 = vmatprep.subr.bf16.mxu0 0
    %754 = vmatpush1.bf16.xpose.msra.mxu0 0
    %755 = vmatprep.subr.bf16.mxu0 0
    %756 = vmatpush1.bf16.xpose.msra.mxu0 0
    %757 = vmatprep.subr.bf16.mxu0 0
    %758 = vmatpush1.bf16.xpose.msra.mxu0 0
    %759 = vmatprep.subr.bf16.mxu0 0
    %760 = vmatpush1.bf16.xpose.msra.mxu0 0
    %761 = vmatprep.subr.bf16.mxu0 0
    %762 = vmatpush1.bf16.xpose.msra.mxu0 0
    %763 = vmatprep.subr.bf16.mxu0 0
    %764 = vmatpush1.bf16.xpose.msra.mxu0 0
    %765 = vmatprep.mubr.bf16.mxu0 0
    %766 = vmatmul.mubr.bf16.gmra.mrb[0].mxu0 %v728
    %v767 = vpop.f32.mrb[0].mxu0
    %v768 = vadd.f32 0.0, %v767
    %v769 = vpop.f32.mrb[0].mxu0
    %v770 = vpop.f32.mrb[0].mxu0
    %v771 = vadd.f32 0.0, %v770
    %v772 = vpop.f32.mrb[0].mxu0
    %773 = vdwg.mxu0
    %v775 = vsel %vm538, %v499, 0
    %v778 = vsel %vm538, %v513, 0
    %780 = vmatprep.subr.bf16.mxu0 0
    %781 = vmatpush1.bf16.xpose.msra.mxu0 %v778
    %782 = vmatprep.subr.bf16.mxu0 0
    %783 = vmatpush1.bf16.xpose.msra.mxu0 0
    %784 = vmatprep.subr.bf16.mxu0 0
    %785 = vmatpush1.bf16.xpose.msra.mxu0 0
    %786 = vmatprep.subr.bf16.mxu0 0
    %787 = vmatpush1.bf16.xpose.msra.mxu0 0
    %788 = vmatprep.subr.bf16.mxu0 0
    %789 = vmatpush1.bf16.xpose.msra.mxu0 0
    %790 = vmatprep.subr.bf16.mxu0 0
    %791 = vmatpush1.bf16.xpose.msra.mxu0 0
    %792 = vmatprep.subr.bf16.mxu0 0
    %793 = vmatpush1.bf16.xpose.msra.mxu0 0
    %794 = vmatprep.subr.bf16.mxu0 0
    %795 = vmatpush1.bf16.xpose.msra.mxu0 0
    %796 = vmatprep.subr.bf16.mxu0 0
    %797 = vmatpush1.bf16.xpose.msra.mxu0 0
    %798 = vmatprep.subr.bf16.mxu0 0
    %799 = vmatpush1.bf16.xpose.msra.mxu0 0
    %800 = vmatprep.subr.bf16.mxu0 0
    %801 = vmatpush1.bf16.xpose.msra.mxu0 0
    %802 = vmatprep.subr.bf16.mxu0 0
    %803 = vmatpush1.bf16.xpose.msra.mxu0 0
    %804 = vmatprep.subr.bf16.mxu0 0
    %805 = vmatpush1.bf16.xpose.msra.mxu0 0
    %806 = vmatprep.subr.bf16.mxu0 0
    %807 = vmatpush1.bf16.xpose.msra.mxu0 0
    %808 = vmatprep.subr.bf16.mxu0 0
    %809 = vmatpush1.bf16.xpose.msra.mxu0 0
    %810 = vmatprep.subr.bf16.mxu0 0
    %811 = vmatpush1.bf16.xpose.msra.mxu0 0
    %812 = vmatprep.mubr.bf16.mxu0 0
    %813 = vmatmul.mubr.bf16.gmra.mrb[0].mxu0 %v775
    %v814 = vpop.f32.mrb[0].mxu0
    %v815 = vadd.f32 0.0, %v814
    %v816 = vpop.f32.mrb[0].mxu0
    %v817 = vpop.f32.mrb[0].mxu0
    %v818 = vadd.f32 0.0, %v817
    %v819 = vpop.f32.mrb[0].mxu0
    %820 = vdwg.mxu0
    %v822 = vsel %vm538, %v501, 0
    %v825 = vsel %vm538, %v515, 0
    %827 = vmatprep.subr.bf16.mxu0 0
    %828 = vmatpush1.bf16.xpose.msra.mxu0 %v825
    %829 = vmatprep.subr.bf16.mxu0 0
    %830 = vmatpush1.bf16.xpose.msra.mxu0 0
    %831 = vmatprep.subr.bf16.mxu0 0
    %832 = vmatpush1.bf16.xpose.msra.mxu0 0
    %833 = vmatprep.subr.bf16.mxu0 0
    %834 = vmatpush1.bf16.xpose.msra.mxu0 0
    %835 = vmatprep.subr.bf16.mxu0 0
    %836 = vmatpush1.bf16.xpose.msra.mxu0 0
    %837 = vmatprep.subr.bf16.mxu0 0
    %838 = vmatpush1.bf16.xpose.msra.mxu0 0
    %839 = vmatprep.subr.bf16.mxu0 0
    %840 = vmatpush1.bf16.xpose.msra.mxu0 0
    %841 = vmatprep.subr.bf16.mxu0 0
    %842 = vmatpush1.bf16.xpose.msra.mxu0 0
    %843 = vmatprep.subr.bf16.mxu0 0
    %844 = vmatpush1.bf16.xpose.msra.mxu0 0
    %845 = vmatprep.subr.bf16.mxu0 0
    %846 = vmatpush1.bf16.xpose.msra.mxu0 0
    %847 = vmatprep.subr.bf16.mxu0 0
    %848 = vmatpush1.bf16.xpose.msra.mxu0 0
    %849 = vmatprep.subr.bf16.mxu0 0
    %850 = vmatpush1.bf16.xpose.msra.mxu0 0
    %851 = vmatprep.subr.bf16.mxu0 0
    %852 = vmatpush1.bf16.xpose.msra.mxu0 0
    %853 = vmatprep.subr.bf16.mxu0 0
    %854 = vmatpush1.bf16.xpose.msra.mxu0 0
    %855 = vmatprep.subr.bf16.mxu0 0
    %856 = vmatpush1.bf16.xpose.msra.mxu0 0
    %857 = vmatprep.subr.bf16.mxu0 0
    %858 = vmatpush1.bf16.xpose.msra.mxu0 0
    %859 = vmatprep.mubr.bf16.mxu0 0
    %860 = vmatmul.mubr.bf16.gmra.mrb[0].mxu0 %v822
    %v861 = vpop.f32.mrb[0].mxu0
    %v862 = vadd.f32 0.0, %v861
    %v863 = vpop.f32.mrb[0].mxu0
    %v864 = vpop.f32.mrb[0].mxu0
    %v865 = vadd.f32 0.0, %v864
    %v866 = vpop.f32.mrb[0].mxu0
    %867 = vdwg.mxu0
    %v869 = vsel %vm538, %v503, 0
    %v872 = vsel %vm538, %v517, 0
    %874 = vmatprep.subr.bf16.mxu0 0
    %875 = vmatpush1.bf16.xpose.msra.mxu0 %v872
    %876 = vmatprep.subr.bf16.mxu0 0
    %877 = vmatpush1.bf16.xpose.msra.mxu0 0
    %878 = vmatprep.subr.bf16.mxu0 0
    %879 = vmatpush1.bf16.xpose.msra.mxu0 0
    %880 = vmatprep.subr.bf16.mxu0 0
    %881 = vmatpush1.bf16.xpose.msra.mxu0 0
    %882 = vmatprep.subr.bf16.mxu0 0
    %883 = vmatpush1.bf16.xpose.msra.mxu0 0
    %884 = vmatprep.subr.bf16.mxu0 0
    %885 = vmatpush1.bf16.xpose.msra.mxu0 0
    %886 = vmatprep.subr.bf16.mxu0 0
    %887 = vmatpush1.bf16.xpose.msra.mxu0 0
    %888 = vmatprep.subr.bf16.mxu0 0
    %889 = vmatpush1.bf16.xpose.msra.mxu0 0
    %890 = vmatprep.subr.bf16.mxu0 0
    %891 = vmatpush1.bf16.xpose.msra.mxu0 0
    %892 = vmatprep.subr.bf16.mxu0 0
    %893 = vmatpush1.bf16.xpose.msra.mxu0 0
    %894 = vmatprep.subr.bf16.mxu0 0
    %895 = vmatpush1.bf16.xpose.msra.mxu0 0
    %896 = vmatprep.subr.bf16.mxu0 0
    %897 = vmatpush1.bf16.xpose.msra.mxu0 0
    %898 = vmatprep.subr.bf16.mxu0 0
    %899 = vmatpush1.bf16.xpose.msra.mxu0 0
    %900 = vmatprep.subr.bf16.mxu0 0
    %901 = vmatpush1.bf16.xpose.msra.mxu0 0
    %902 = vmatprep.subr.bf16.mxu0 0
    %903 = vmatpush1.bf16.xpose.msra.mxu0 0
    %904 = vmatprep.subr.bf16.mxu0 0
    %905 = vmatpush1.bf16.xpose.msra.mxu0 0
    %906 = vmatprep.mubr.bf16.mxu0 0
    %907 = vmatmul.mubr.bf16.gmra.mrb[0].mxu0 %v869
    %v908 = vpop.f32.mrb[0].mxu0
    %v909 = vadd.f32 0.0, %v908
    %v910 = vpop.f32.mrb[0].mxu0
    %v911 = vpop.f32.mrb[0].mxu0
    %v912 = vadd.f32 0.0, %v911
    %v913 = vpop.f32.mrb[0].mxu0
    %914 = vdwg.mxu0
    %vm915 = vcmask 130048
    %v916 = vsel %vm915, %v580, -inf
    %917 = vmax.xlane.f32.xlu0 %v916
    %v918 = vpop.xlane.xlu0 %917
    %v919 = vsel %vm915, %v583, -inf
    %920 = vmax.xlane.f32.xlu0 %v919
    %v921 = vpop.xlane.xlu0 %920
    %v922 = vsel %vm915, %v627, -inf
    %923 = vmax.xlane.f32.xlu0 %v922
    %v924 = vpop.xlane.xlu0 %923
    %v925 = vsel %vm915, %v630, -inf
    %926 = vmax.xlane.f32.xlu0 %v925
    %v927 = vpop.xlane.xlu0 %926
    %v928 = vsel %vm915, %v674, -inf
    %929 = vmax.xlane.f32.xlu0 %v928
    %v930 = vpop.xlane.xlu0 %929
    %v931 = vsel %vm915, %v677, -inf
    %932 = vmax.xlane.f32.xlu0 %v931
    %v933 = vpop.xlane.xlu0 %932
    %v934 = vsel %vm915, %v721, -inf
    %935 = vmax.xlane.f32.xlu0 %v934
    %v936 = vpop.xlane.xlu0 %935
    %v937 = vsel %vm915, %v724, -inf
    %938 = vmax.xlane.f32.xlu0 %v937
    %v939 = vpop.xlane.xlu0 %938
    %v940 = vsel %vm915, %v768, -inf
    %941 = vmax.xlane.f32.xlu0 %v940
    %v942 = vpop.xlane.xlu0 %941
    %v943 = vsel %vm915, %v771, -inf
    %944 = vmax.xlane.f32.xlu0 %v943
    %v945 = vpop.xlane.xlu0 %944
    %v946 = vsel %vm915, %v815, -inf
    %947 = vmax.xlane.f32.xlu0 %v946
    %v948 = vpop.xlane.xlu0 %947
    %v949 = vsel %vm915, %v818, -inf
    %950 = vmax.xlane.f32.xlu0 %v949
    %v951 = vpop.xlane.xlu0 %950
    %v952 = vsel %vm915, %v862, -inf
    %953 = vmax.xlane.f32.xlu0 %v952
    %v954 = vpop.xlane.xlu0 %953
    %v955 = vsel %vm915, %v865, -inf
    %956 = vmax.xlane.f32.xlu0 %v955
    %v957 = vpop.xlane.xlu0 %956
    %v958 = vsel %vm915, %v909, -inf
    %959 = vmax.xlane.f32.xlu0 %v958
    %v960 = vpop.xlane.xlu0 %959
    %v961 = vsel %vm915, %v912, -inf
    %962 = vmax.xlane.f32.xlu0 %v961
    %v963 = vpop.xlane.xlu0 %962
    %v964 = vsub.f32 %v580, %v918
    %v965 = vsub.f32 %v583, %v921
    %v966 = vsub.f32 %v627, %v924
    %v967 = vsub.f32 %v630, %v927
    %v968 = vsub.f32 %v674, %v930
    %v969 = vsub.f32 %v677, %v933
    %v970 = vsub.f32 %v721, %v936
    %v971 = vsub.f32 %v724, %v939
    %v972 = vsub.f32 %v768, %v942
    %v973 = vsub.f32 %v771, %v945
    %v974 = vsub.f32 %v815, %v948
    %v975 = vsub.f32 %v818, %v951
    %v976 = vsub.f32 %v862, %v954
    %v977 = vsub.f32 %v865, %v957
    %v978 = vsub.f32 %v909, %v960
    %v979 = vsub.f32 %v912, %v963
    %v980 = vmul.f32 %v964, 1.442695
    %v981 = vpow.pop %v980
    %v982 = vmul.f32 %v965, 1.442695
    %v983 = vpow.pop %v982
    %v984 = vmul.f32 %v966, 1.442695
    %v985 = vpow.pop %v984
    %v986 = vmul.f32 %v967, 1.442695
    %v987 = vpow.pop %v986
    %v988 = vmul.f32 %v968, 1.442695
    %v989 = vpow.pop %v988
    %v990 = vmul.f32 %v969, 1.442695
    %v991 = vpow.pop %v990
    %v992 = vmul.f32 %v970, 1.442695
    %v993 = vpow.pop %v992
    %v994 = vmul.f32 %v971, 1.442695
    %v995 = vpow.pop %v994
    %v996 = vmul.f32 %v972, 1.442695
    %v997 = vpow.pop %v996
    %v998 = vmul.f32 %v973, 1.442695
    %v999 = vpow.pop %v998
    %v1000 = vmul.f32 %v974, 1.442695
    %v1001 = vpow.pop %v1000
    %v1002 = vmul.f32 %v975, 1.442695
    %v1003 = vpow.pop %v1002
    %v1004 = vmul.f32 %v976, 1.442695
    %v1005 = vpow.pop %v1004
    %v1006 = vmul.f32 %v977, 1.442695
    %v1007 = vpow.pop %v1006
    %v1008 = vmul.f32 %v978, 1.442695
    %v1009 = vpow.pop %v1008
    %v1010 = vmul.f32 %v979, 1.442695
    %v1011 = vpow.pop %v1010
    %v1012 = vsel %vm915, %v981, 0.0
    %1013 = vadd.xlane.f32.xlu0 %v1012
    %v1014 = vpop.xlane.xlu0 %1013
    %v1015 = vsel %vm915, %v983, 0.0
    %1016 = vadd.xlane.f32.xlu0 %v1015
    %v1017 = vpop.xlane.xlu0 %1016
    %v1018 = vsel %vm915, %v985, 0.0
    %1019 = vadd.xlane.f32.xlu0 %v1018
    %v1020 = vpop.xlane.xlu0 %1019
    %v1021 = vsel %vm915, %v987, 0.0
    %1022 = vadd.xlane.f32.xlu0 %v1021
    %v1023 = vpop.xlane.xlu0 %1022
    %v1024 = vsel %vm915, %v989, 0.0
    %1025 = vadd.xlane.f32.xlu0 %v1024
    %v1026 = vpop.xlane.xlu0 %1025
    %v1027 = vsel %vm915, %v991, 0.0
    %1028 = vadd.xlane.f32.xlu0 %v1027
    %v1029 = vpop.xlane.xlu0 %1028
    %v1030 = vsel %vm915, %v993, 0.0
    %1031 = vadd.xlane.f32.xlu0 %v1030
    %v1032 = vpop.xlane.xlu0 %1031
    %v1033 = vsel %vm915, %v995, 0.0
    %1034 = vadd.xlane.f32.xlu0 %v1033
    %v1035 = vpop.xlane.xlu0 %1034
    %v1036 = vsel %vm915, %v997, 0.0
    %1037 = vadd.xlane.f32.xlu0 %v1036
    %v1038 = vpop.xlane.xlu0 %1037
    %v1039 = vsel %vm915, %v999, 0.0
    %1040 = vadd.xlane.f32.xlu0 %v1039
    %v1041 = vpop.xlane.xlu0 %1040
    %v1042 = vsel %vm915, %v1001, 0.0
    %1043 = vadd.xlane.f32.xlu0 %v1042
    %v1044 = vpop.xlane.xlu0 %1043
    %v1045 = vsel %vm915, %v1003, 0.0
    %1046 = vadd.xlane.f32.xlu0 %v1045
    %v1047 = vpop.xlane.xlu0 %1046
    %v1048 = vsel %vm915, %v1005, 0.0
    %1049 = vadd.xlane.f32.xlu0 %v1048
    %v1050 = vpop.xlane.xlu0 %1049
    %v1051 = vsel %vm915, %v1007, 0.0
    %1052 = vadd.xlane.f32.xlu0 %v1051
    %v1053 = vpop.xlane.xlu0 %1052
    %v1054 = vsel %vm915, %v1009, 0.0
    %1055 = vadd.xlane.f32.xlu0 %v1054
    %v1056 = vpop.xlane.xlu0 %1055
    %v1057 = vsel %vm915, %v1011, 0.0
    %1058 = vadd.xlane.f32.xlu0 %v1057
    %v1059 = vpop.xlane.xlu0 %1058
    %v1060 = vrcp.pop %v1014
    %v1061 = vrcp.pop %v1017
    %v1062 = vrcp.pop %v1020
    %v1063 = vrcp.pop %v1023
    %v1064 = vrcp.pop %v1026
    %v1065 = vrcp.pop %v1029
    %v1066 = vrcp.pop %v1032
    %v1067 = vrcp.pop %v1035
    %v1068 = vrcp.pop %v1038
    %v1069 = vrcp.pop %v1041
    %v1070 = vrcp.pop %v1044
    %v1071 = vrcp.pop %v1047
    %v1072 = vrcp.pop %v1050
    %v1073 = vrcp.pop %v1053
    %v1074 = vrcp.pop %v1056
    %v1075 = vrcp.pop %v1059
    %v1076 = vmul.f32 %v981, %v1060
    %v1077 = vmul.f32 %v983, %v1061
    %v1078 = vmul.f32 %v985, %v1062
    %v1079 = vmul.f32 %v987, %v1063
    %v1080 = vmul.f32 %v989, %v1064
    %v1081 = vmul.f32 %v991, %v1065
    %v1082 = vmul.f32 %v993, %v1066
    %v1083 = vmul.f32 %v995, %v1067
    %v1084 = vmul.f32 %v997, %v1068
    %v1085 = vmul.f32 %v999, %v1069
    %v1086 = vmul.f32 %v1001, %v1070
    %v1087 = vmul.f32 %v1003, %v1071
    %v1088 = vmul.f32 %v1005, %v1072
    %v1089 = vmul.f32 %v1007, %v1073
    %v1090 = vmul.f32 %v1009, %v1074
    %v1091 = vmul.f32 %v1011, %v1075
    %v1092 = vpack.c.bf16 %v1077, %v1076
    %v1093 = vpack.c.bf16 %v1079, %v1078
    %v1094 = vpack.c.bf16 %v1081, %v1080
    %v1095 = vpack.c.bf16 %v1083, %v1082
    %v1096 = vpack.c.bf16 %v1085, %v1084
    %v1097 = vpack.c.bf16 %v1087, %v1086
    %v1098 = vpack.c.bf16 %v1089, %v1088
    %v1099 = vpack.c.bf16 %v1091, %v1090
    %v1101 = vsel %vm915, %v1092, 0
    %1103 = vmatprep.subr.bf16.mxu0 0
    %1104 = vmatpush1.bf16.msra.mxu0 %v488
    %1105 = vmatprep.subr.bf16.mxu0 0
    %1106 = vmatpush1.bf16.msra.mxu0 0
    %1107 = vmatprep.subr.bf16.mxu0 0
    %1108 = vmatpush1.bf16.msra.mxu0 0
    %1109 = vmatprep.subr.bf16.mxu0 0
    %1110 = vmatpush1.bf16.msra.mxu0 0
    %1111 = vmatprep.subr.bf16.mxu0 0
    %1112 = vmatpush1.bf16.msra.mxu0 0
    %1113 = vmatprep.subr.bf16.mxu0 0
    %1114 = vmatpush1.bf16.msra.mxu0 0
    %1115 = vmatprep.subr.bf16.mxu0 0
    %1116 = vmatpush1.bf16.msra.mxu0 0
    %1117 = vmatprep.subr.bf16.mxu0 0
    %1118 = vmatpush1.bf16.msra.mxu0 0
    %1119 = vmatprep.subr.bf16.mxu0 0
    %1120 = vmatpush1.bf16.msra.mxu0 0
    %1121 = vmatprep.subr.bf16.mxu0 0
    %1122 = vmatpush1.bf16.msra.mxu0 0
    %1123 = vmatprep.subr.bf16.mxu0 0
    %1124 = vmatpush1.bf16.msra.mxu0 0
    %1125 = vmatprep.subr.bf16.mxu0 0
    %1126 = vmatpush1.bf16.msra.mxu0 0
    %1127 = vmatprep.subr.bf16.mxu0 0
    %1128 = vmatpush1.bf16.msra.mxu0 0
    %1129 = vmatprep.subr.bf16.mxu0 0
    %1130 = vmatpush1.bf16.msra.mxu0 0
    %1131 = vmatprep.subr.bf16.mxu0 0
    %1132 = vmatpush1.bf16.msra.mxu0 0
    %1133 = vmatprep.subr.bf16.mxu0 0
    %1134 = vmatpush1.bf16.msra.mxu0 0
    %1135 = vmatprep.mubr.bf16.mxu0 0
    %1136 = vmatmul.mubr.bf16.gmra.mrb[0].mxu0 %v1101
    %v1137 = vpop.f32.mrb[0].mxu0
    %v1138 = vadd.f32 0.0, %v1137
    %v1139 = vpop.f32.mrb[0].mxu0
    %v1140 = vpop.f32.mrb[0].mxu0
    %v1141 = vadd.f32 0.0, %v1140
    %v1142 = vpop.f32.mrb[0].mxu0
    %1143 = vdwg.mxu0
    %v1145 = vsel %vm915, %v1093, 0
    %1147 = vmatprep.subr.bf16.mxu0 0
    %1148 = vmatpush1.bf16.msra.mxu0 %v489
    %1149 = vmatprep.subr.bf16.mxu0 0
    %1150 = vmatpush1.bf16.msra.mxu0 0
    %1151 = vmatprep.subr.bf16.mxu0 0
    %1152 = vmatpush1.bf16.msra.mxu0 0
    %1153 = vmatprep.subr.bf16.mxu0 0
    %1154 = vmatpush1.bf16.msra.mxu0 0
    %1155 = vmatprep.subr.bf16.mxu0 0
    %1156 = vmatpush1.bf16.msra.mxu0 0
    %1157 = vmatprep.subr.bf16.mxu0 0
    %1158 = vmatpush1.bf16.msra.mxu0 0
    %1159 = vmatprep.subr.bf16.mxu0 0
    %1160 = vmatpush1.bf16.msra.mxu0 0
    %1161 = vmatprep.subr.bf16.mxu0 0
    %1162 = vmatpush1.bf16.msra.mxu0 0
    %1163 = vmatprep.subr.bf16.mxu0 0
    %1164 = vmatpush1.bf16.msra.mxu0 0
    %1165 = vmatprep.subr.bf16.mxu0 0
    %1166 = vmatpush1.bf16.msra.mxu0 0
    %1167 = vmatprep.subr.bf16.mxu0 0
    %1168 = vmatpush1.bf16.msra.mxu0 0
    %1169 = vmatprep.subr.bf16.mxu0 0
    %1170 = vmatpush1.bf16.msra.mxu0 0
    %1171 = vmatprep.subr.bf16.mxu0 0
    %1172 = vmatpush1.bf16.msra.mxu0 0
    %1173 = vmatprep.subr.bf16.mxu0 0
    %1174 = vmatpush1.bf16.msra.mxu0 0
    %1175 = vmatprep.subr.bf16.mxu0 0
    %1176 = vmatpush1.bf16.msra.mxu0 0
    %1177 = vmatprep.subr.bf16.mxu0 0
    %1178 = vmatpush1.bf16.msra.mxu0 0
    %1179 = vmatprep.mubr.bf16.mxu0 0
    %1180 = vmatmul.mubr.bf16.gmra.mrb[0].mxu0 %v1145
    %v1181 = vpop.f32.mrb[0].mxu0
    %v1182 = vadd.f32 0.0, %v1181
    %v1183 = vpop.f32.mrb[0].mxu0
    %v1184 = vpop.f32.mrb[0].mxu0
    %v1185 = vadd.f32 0.0, %v1184
    %v1186 = vpop.f32.mrb[0].mxu0
    %1187 = vdwg.mxu0
    %v1189 = vsel %vm915, %v1094, 0
    %1191 = vmatprep.subr.bf16.mxu0 0
    %1192 = vmatpush1.bf16.msra.mxu0 %v521
    %1193 = vmatprep.subr.bf16.mxu0 0
    %1194 = vmatpush1.bf16.msra.mxu0 0
    %1195 = vmatprep.subr.bf16.mxu0 0
    %1196 = vmatpush1.bf16.msra.mxu0 0
    %1197 = vmatprep.subr.bf16.mxu0 0
    %1198 = vmatpush1.bf16.msra.mxu0 0
    %1199 = vmatprep.subr.bf16.mxu0 0
    %1200 = vmatpush1.bf16.msra.mxu0 0
    %1201 = vmatprep.subr.bf16.mxu0 0
    %1202 = vmatpush1.bf16.msra.mxu0 0
    %1203 = vmatprep.subr.bf16.mxu0 0
    %1204 = vmatpush1.bf16.msra.mxu0 0
    %1205 = vmatprep.subr.bf16.mxu0 0
    %1206 = vmatpush1.bf16.msra.mxu0 0
    %1207 = vmatprep.subr.bf16.mxu0 0
    %1208 = vmatpush1.bf16.msra.mxu0 0
    %1209 = vmatprep.subr.bf16.mxu0 0
    %1210 = vmatpush1.bf16.msra.mxu0 0
    %1211 = vmatprep.subr.bf16.mxu0 0
    %1212 = vmatpush1.bf16.msra.mxu0 0
    %1213 = vmatprep.subr.bf16.mxu0 0
    %1214 = vmatpush1.bf16.msra.mxu0 0
    %1215 = vmatprep.subr.bf16.mxu0 0
    %1216 = vmatpush1.bf16.msra.mxu0 0
    %1217 = vmatprep.subr.bf16.mxu0 0
    %1218 = vmatpush1.bf16.msra.mxu0 0
    %1219 = vmatprep.subr.bf16.mxu0 0
    %1220 = vmatpush1.bf16.msra.mxu0 0
    %1221 = vmatprep.subr.bf16.mxu0 0
    %1222 = vmatpush1.bf16.msra.mxu0 0
    %1223 = vmatprep.mubr.bf16.mxu0 0
    %1224 = vmatmul.mubr.bf16.gmra.mrb[0].mxu0 %v1189
    %v1225 = vpop.f32.mrb[0].mxu0
    %v1226 = vadd.f32 0.0, %v1225
    %v1227 = vpop.f32.mrb[0].mxu0
    %v1228 = vpop.f32.mrb[0].mxu0
    %v1229 = vadd.f32 0.0, %v1228
    %v1230 = vpop.f32.mrb[0].mxu0
    %1231 = vdwg.mxu0
    %v1233 = vsel %vm915, %v1095, 0
    %1235 = vmatprep.subr.bf16.mxu0 0
    %1236 = vmatpush1.bf16.msra.mxu0 %v523
    %1237 = vmatprep.subr.bf16.mxu0 0
    %1238 = vmatpush1.bf16.msra.mxu0 0
    %1239 = vmatprep.subr.bf16.mxu0 0
    %1240 = vmatpush1.bf16.msra.mxu0 0
    %1241 = vmatprep.subr.bf16.mxu0 0
    %1242 = vmatpush1.bf16.msra.mxu0 0
    %1243 = vmatprep.subr.bf16.mxu0 0
    %1244 = vmatpush1.bf16.msra.mxu0 0
    %1245 = vmatprep.subr.bf16.mxu0 0
    %1246 = vmatpush1.bf16.msra.mxu0 0
    %1247 = vmatprep.subr.bf16.mxu0 0
    %1248 = vmatpush1.bf16.msra.mxu0 0
    %1249 = vmatprep.subr.bf16.mxu0 0
    %1250 = vmatpush1.bf16.msra.mxu0 0
    %1251 = vmatprep.subr.bf16.mxu0 0
    %1252 = vmatpush1.bf16.msra.mxu0 0
    %1253 = vmatprep.subr.bf16.mxu0 0
    %1254 = vmatpush1.bf16.msra.mxu0 0
    %1255 = vmatprep.subr.bf16.mxu0 0
    %1256 = vmatpush1.bf16.msra.mxu0 0
    %1257 = vmatprep.subr.bf16.mxu0 0
    %1258 = vmatpush1.bf16.msra.mxu0 0
    %1259 = vmatprep.subr.bf16.mxu0 0
    %1260 = vmatpush1.bf16.msra.mxu0 0
    %1261 = vmatprep.subr.bf16.mxu0 0
    %1262 = vmatpush1.bf16.msra.mxu0 0
    %1263 = vmatprep.subr.bf16.mxu0 0
    %1264 = vmatpush1.bf16.msra.mxu0 0
    %1265 = vmatprep.subr.bf16.mxu0 0
    %1266 = vmatpush1.bf16.msra.mxu0 0
    %1267 = vmatprep.mubr.bf16.mxu0 0
    %1268 = vmatmul.mubr.bf16.gmra.mrb[0].mxu0 %v1233
    %v1269 = vpop.f32.mrb[0].mxu0
    %v1270 = vadd.f32 0.0, %v1269
    %v1271 = vpop.f32.mrb[0].mxu0
    %v1272 = vpop.f32.mrb[0].mxu0
    %v1273 = vadd.f32 0.0, %v1272
    %v1274 = vpop.f32.mrb[0].mxu0
    %1275 = vdwg.mxu0
    %v1277 = vsel %vm915, %v1096, 0
    %1279 = vmatprep.subr.bf16.mxu0 0
    %1280 = vmatpush1.bf16.msra.mxu0 %v527
    %1281 = vmatprep.subr.bf16.mxu0 0
    %1282 = vmatpush1.bf16.msra.mxu0 0
    %1283 = vmatprep.subr.bf16.mxu0 0
    %1284 = vmatpush1.bf16.msra.mxu0 0
    %1285 = vmatprep.subr.bf16.mxu0 0
    %1286 = vmatpush1.bf16.msra.mxu0 0
    %1287 = vmatprep.subr.bf16.mxu0 0
    %1288 = vmatpush1.bf16.msra.mxu0 0
    %1289 = vmatprep.subr.bf16.mxu0 0
    %1290 = vmatpush1.bf16.msra.mxu0 0
    %1291 = vmatprep.subr.bf16.mxu0 0
    %1292 = vmatpush1.bf16.msra.mxu0 0
    %1293 = vmatprep.subr.bf16.mxu0 0
    %1294 = vmatpush1.bf16.msra.mxu0 0
    %1295 = vmatprep.subr.bf16.mxu0 0
    %1296 = vmatpush1.bf16.msra.mxu0 0
    %1297 = vmatprep.subr.bf16.mxu0 0
    %1298 = vmatpush1.bf16.msra.mxu0 0
    %1299 = vmatprep.subr.bf16.mxu0 0
    %1300 = vmatpush1.bf16.msra.mxu0 0
    %1301 = vmatprep.subr.bf16.mxu0 0
    %1302 = vmatpush1.bf16.msra.mxu0 0
    %1303 = vmatprep.subr.bf16.mxu0 0
    %1304 = vmatpush1.bf16.msra.mxu0 0
    %1305 = vmatprep.subr.bf16.mxu0 0
    %1306 = vmatpush1.bf16.msra.mxu0 0
    %1307 = vmatprep.subr.bf16.mxu0 0
    %1308 = vmatpush1.bf16.msra.mxu0 0
    %1309 = vmatprep.subr.bf16.mxu0 0
    %1310 = vmatpush1.bf16.msra.mxu0 0
    %1311 = vmatprep.mubr.bf16.mxu0 0
    %1312 = vmatmul.mubr.bf16.gmra.mrb[0].mxu0 %v1277
    %v1313 = vpop.f32.mrb[0].mxu0
    %v1314 = vadd.f32 0.0, %v1313
    %v1315 = vpop.f32.mrb[0].mxu0
    %v1316 = vpop.f32.mrb[0].mxu0
    %v1317 = vadd.f32 0.0, %v1316
    %v1318 = vpop.f32.mrb[0].mxu0
    %1319 = vdwg.mxu0
    %v1321 = vsel %vm915, %v1097, 0
    %1323 = vmatprep.subr.bf16.mxu0 0
    %1324 = vmatpush1.bf16.msra.mxu0 %v529
    %1325 = vmatprep.subr.bf16.mxu0 0
    %1326 = vmatpush1.bf16.msra.mxu0 0
    %1327 = vmatprep.subr.bf16.mxu0 0
    %1328 = vmatpush1.bf16.msra.mxu0 0
    %1329 = vmatprep.subr.bf16.mxu0 0
    %1330 = vmatpush1.bf16.msra.mxu0 0
    %1331 = vmatprep.subr.bf16.mxu0 0
    %1332 = vmatpush1.bf16.msra.mxu0 0
    %1333 = vmatprep.subr.bf16.mxu0 0
    %1334 = vmatpush1.bf16.msra.mxu0 0
    %1335 = vmatprep.subr.bf16.mxu0 0
    %1336 = vmatpush1.bf16.msra.mxu0 0
    %1337 = vmatprep.subr.bf16.mxu0 0
    %1338 = vmatpush1.bf16.msra.mxu0 0
    %1339 = vmatprep.subr.bf16.mxu0 0
    %1340 = vmatpush1.bf16.msra.mxu0 0
    %1341 = vmatprep.subr.bf16.mxu0 0
    %1342 = vmatpush1.bf16.msra.mxu0 0
    %1343 = vmatprep.subr.bf16.mxu0 0
    %1344 = vmatpush1.bf16.msra.mxu0 0
    %1345 = vmatprep.subr.bf16.mxu0 0
    %1346 = vmatpush1.bf16.msra.mxu0 0
    %1347 = vmatprep.subr.bf16.mxu0 0
    %1348 = vmatpush1.bf16.msra.mxu0 0
    %1349 = vmatprep.subr.bf16.mxu0 0
    %1350 = vmatpush1.bf16.msra.mxu0 0
    %1351 = vmatprep.subr.bf16.mxu0 0
    %1352 = vmatpush1.bf16.msra.mxu0 0
    %1353 = vmatprep.subr.bf16.mxu0 0
    %1354 = vmatpush1.bf16.msra.mxu0 0
    %1355 = vmatprep.mubr.bf16.mxu0 0
    %1356 = vmatmul.mubr.bf16.gmra.mrb[0].mxu0 %v1321
    %v1357 = vpop.f32.mrb[0].mxu0
    %v1358 = vadd.f32 0.0, %v1357
    %v1359 = vpop.f32.mrb[0].mxu0
    %v1360 = vpop.f32.mrb[0].mxu0
    %v1361 = vadd.f32 0.0, %v1360
    %v1362 = vpop.f32.mrb[0].mxu0
    %1363 = vdwg.mxu0
    %v1365 = vsel %vm915, %v1098, 0
    %1367 = vmatprep.subr.bf16.mxu0 0
    %1368 = vmatpush1.bf16.msra.mxu0 %v533
    %1369 = vmatprep.subr.bf16.mxu0 0
    %1370 = vmatpush1.bf16.msra.mxu0 0
    %1371 = vmatprep.subr.bf16.mxu0 0
    %1372 = vmatpush1.bf16.msra.mxu0 0
    %1373 = vmatprep.subr.bf16.mxu0 0
    %1374 = vmatpush1.bf16.msra.mxu0 0
    %1375 = vmatprep.subr.bf16.mxu0 0
    %1376 = vmatpush1.bf16.msra.mxu0 0
    %1377 = vmatprep.subr.bf16.mxu0 0
    %1378 = vmatpush1.bf16.msra.mxu0 0
    %1379 = vmatprep.subr.bf16.mxu0 0
    %1380 = vmatpush1.bf16.msra.mxu0 0
    %1381 = vmatprep.subr.bf16.mxu0 0
    %1382 = vmatpush1.bf16.msra.mxu0 0
    %1383 = vmatprep.subr.bf16.mxu0 0
    %1384 = vmatpush1.bf16.msra.mxu0 0
    %1385 = vmatprep.subr.bf16.mxu0 0
    %1386 = vmatpush1.bf16.msra.mxu0 0
    %1387 = vmatprep.subr.bf16.mxu0 0
    %1388 = vmatpush1.bf16.msra.mxu0 0
    %1389 = vmatprep.subr.bf16.mxu0 0
    %1390 = vmatpush1.bf16.msra.mxu0 0
    %1391 = vmatprep.subr.bf16.mxu0 0
    %1392 = vmatpush1.bf16.msra.mxu0 0
    %1393 = vmatprep.subr.bf16.mxu0 0
    %1394 = vmatpush1.bf16.msra.mxu0 0
    %1395 = vmatprep.subr.bf16.mxu0 0
    %1396 = vmatpush1.bf16.msra.mxu0 0
    %1397 = vmatprep.subr.bf16.mxu0 0
    %1398 = vmatpush1.bf16.msra.mxu0 0
    %1399 = vmatprep.mubr.bf16.mxu0 0
    %1400 = vmatmul.mubr.bf16.gmra.mrb[0].mxu0 %v1365
    %v1401 = vpop.f32.mrb[0].mxu0
    %v1402 = vadd.f32 0.0, %v1401
    %v1403 = vpop.f32.mrb[0].mxu0
    %v1404 = vpop.f32.mrb[0].mxu0
    %v1405 = vadd.f32 0.0, %v1404
    %v1406 = vpop.f32.mrb[0].mxu0
    %1407 = vdwg.mxu0
    %v1409 = vsel %vm915, %v1099, 0
    %1411 = vmatprep.subr.bf16.mxu0 0
    %1412 = vmatpush1.bf16.msra.mxu0 %v535
    %1413 = vmatprep.subr.bf16.mxu0 0
    %1414 = vmatpush1.bf16.msra.mxu0 0
    %1415 = vmatprep.subr.bf16.mxu0 0
    %1416 = vmatpush1.bf16.msra.mxu0 0
    %1417 = vmatprep.subr.bf16.mxu0 0
    %1418 = vmatpush1.bf16.msra.mxu0 0
    %1419 = vmatprep.subr.bf16.mxu0 0
    %1420 = vmatpush1.bf16.msra.mxu0 0
    %1421 = vmatprep.subr.bf16.mxu0 0
    %1422 = vmatpush1.bf16.msra.mxu0 0
    %1423 = vmatprep.subr.bf16.mxu0 0
    %1424 = vmatpush1.bf16.msra.mxu0 0
    %1425 = vmatprep.subr.bf16.mxu0 0
    %1426 = vmatpush1.bf16.msra.mxu0 0
    %1427 = vmatprep.subr.bf16.mxu0 0
    %1428 = vmatpush1.bf16.msra.mxu0 0
    %1429 = vmatprep.subr.bf16.mxu0 0
    %1430 = vmatpush1.bf16.msra.mxu0 0
    %1431 = vmatprep.subr.bf16.mxu0 0
    %1432 = vmatpush1.bf16.msra.mxu0 0
    %1433 = vmatprep.subr.bf16.mxu0 0
    %1434 = vmatpush1.bf16.msra.mxu0 0
    %1435 = vmatprep.subr.bf16.mxu0 0
    %1436 = vmatpush1.bf16.msra.mxu0 0
    %1437 = vmatprep.subr.bf16.mxu0 0
    %1438 = vmatpush1.bf16.msra.mxu0 0
    %1439 = vmatprep.subr.bf16.mxu0 0
    %1440 = vmatpush1.bf16.msra.mxu0 0
    %1441 = vmatprep.subr.bf16.mxu0 0
    %1442 = vmatpush1.bf16.msra.mxu0 0
    %1443 = vmatprep.mubr.bf16.mxu0 0
    %1444 = vmatmul.mubr.bf16.gmra.mrb[0].mxu0 %v1409
    %v1445 = vpop.f32.mrb[0].mxu0
    %v1446 = vadd.f32 0.0, %v1445
    %v1447 = vpop.f32.mrb[0].mxu0
    %v1448 = vpop.f32.mrb[0].mxu0
    %v1449 = vadd.f32 0.0, %v1448
    %v1450 = vpop.f32.mrb[0].mxu0
    %1451 = vdwg.mxu0
    %1456 = vrot.lane.b32.xlu0 %v1226, 32
    %v1457 = vpop.permute.xlu0 %1456
    %1458 = vrot.lane.b32.xlu0 %v1229, 32
    %v1459 = vpop.permute.xlu0 %1458
    %1460 = vrot.lane.b32.xlu0 %v1270, 32
    %v1461 = vpop.permute.xlu0 %1460
    %1462 = vrot.lane.b32.xlu0 %v1273, 32
    %v1463 = vpop.permute.xlu0 %1462
    %1472 = vrot.lane.b32.xlu0 %v1314, 64
    %v1473 = vpop.permute.xlu0 %1472
    %1474 = vrot.lane.b32.xlu0 %v1317, 64
    %v1475 = vpop.permute.xlu0 %1474
    %1476 = vrot.lane.b32.xlu0 %v1358, 64
    %v1477 = vpop.permute.xlu0 %1476
    %1478 = vrot.lane.b32.xlu0 %v1361, 64
    %v1479 = vpop.permute.xlu0 %1478
    %1488 = vrot.lane.b32.xlu0 %v1402, 96
    %v1489 = vpop.permute.xlu0 %1488
    %1490 = vrot.lane.b32.xlu0 %v1405, 96
    %v1491 = vpop.permute.xlu0 %1490
    %1492 = vrot.lane.b32.xlu0 %v1446, 96
    %v1493 = vpop.permute.xlu0 %1492
    %1494 = vrot.lane.b32.xlu0 %v1449, 96
    %v1495 = vpop.permute.xlu0 %1494
    %v1500 = vsel %vm538, %v1138, %v1457
    %v1501 = vsel %vm538, %v1141, %v1459
    %v1502 = vsel %vm538, %v1182, %v1461
    %v1503 = vsel %vm538, %v1185, %v1463
    %vm1504 = vcmask 523264
    %v1505 = vsel %vm1504, %v1500, %v1473
    %v1506 = vsel %vm1504, %v1501, %v1475
    %v1507 = vsel %vm1504, %v1502, %v1477
    %v1508 = vsel %vm1504, %v1503, %v1479
    %vm1509 = vcmask 785408
    %v1510 = vsel %vm1509, %v1505, %v1489
    %v1511 = vsel %vm1509, %v1506, %v1491
    %v1512 = vsel %vm1509, %v1507, %v1493
    %v1513 = vsel %vm1509, %v1508, %v1495
    %v1514 = vpack.c.bf16 %v1511, %v1510
    %v1515 = vpack.c.bf16 %v1513, %v1512
    %v1516 = vld [vmem:[%s5] sm:$0xf]
    %v1517 = vld [vmem:[%s5 + $0x4] sm:$0xf]
    %v1518 = vld [vmem:[%s5 + $0x8] sm:$0xf]
    %v1519 = vld [vmem:[%s5 + $0xc] sm:$0xf]
    %v1520 = vld [vmem:[%s5 + $0x10] sm:$0xf]
    %v1521 = vld [vmem:[%s5 + $0x14] sm:$0xf]
    %v1522 = vld [vmem:[%s5 + $0x18] sm:$0xf]
    %v1523 = vld [vmem:[%s5 + $0x1c] sm:$0xf]
    %v1524 = vld [vmem:[%s5 + $0x20] sm:$0xf]
    %v1525 = vld [vmem:[%s5 + $0x24] sm:$0xf]
    %v1526 = vld [vmem:[%s5 + $0x28] sm:$0xf]
    %v1527 = vld [vmem:[%s5 + $0x2c] sm:$0xf]
    %v1528 = vld [vmem:[%s5 + $0x30] sm:$0xf]
    %v1529 = vld [vmem:[%s5 + $0x34] sm:$0xf]
    %v1530 = vld [vmem:[%s5 + $0x38] sm:$0xf]
    %v1531 = vld [vmem:[%s5 + $0x3c] sm:$0xf]
    %v1532 = vld [vmem:[#allocation4] sm:$0x1]
    %v1534 = vlaneseq
    %v1535 = vshrl.u32 %v1534, 7
    %v1536 = vsub.s32 0, %v1535
    %v1537 = vrot.slane %v1532, %v1536
    %v1555 = vunpack.c.l.b16 %v1516
    %v1556 = vunpack.c.l.b16 %v1517
    %v1557 = vunpack.c.l.b16 %v1518
    %v1558 = vunpack.c.l.b16 %v1519
    %v1559 = vunpack.c.l.b16 %v1520
    %v1560 = vunpack.c.l.b16 %v1521
    %v1561 = vunpack.c.l.b16 %v1522
    %v1562 = vunpack.c.l.b16 %v1523
    %v1563 = vunpack.c.l.b16 %v1524
    %v1564 = vunpack.c.l.b16 %v1525
    %v1565 = vunpack.c.l.b16 %v1526
    %v1566 = vunpack.c.l.b16 %v1527
    %v1567 = vunpack.c.l.b16 %v1528
    %v1568 = vunpack.c.l.b16 %v1529
    %v1569 = vunpack.c.l.b16 %v1530
    %v1570 = vunpack.c.l.b16 %v1531
    %v1571 = vpack.c.b16 %v1556, %v1555
    %v1572 = vpack.c.b16 %v1558, %v1557
    %v1573 = vpack.c.b16 %v1560, %v1559
    %v1574 = vpack.c.b16 %v1562, %v1561
    %v1575 = vpack.c.b16 %v1564, %v1563
    %v1576 = vpack.c.b16 %v1566, %v1565
    %v1577 = vpack.c.b16 %v1568, %v1567
    %v1578 = vpack.c.b16 %v1570, %v1569
    %1587 = vmatprep.subr.bf16.mxu0 0
    %1588 = vmatpush1.bf16.msra.mxu0 %v1571
    %1589 = vmatprep.subr.bf16.mxu0 0
    %1590 = vmatpush1.bf16.msra.mxu0 %v1572
    %1591 = vmatprep.subr.bf16.mxu0 0
    %1592 = vmatpush1.bf16.msra.mxu0 %v1573
    %1593 = vmatprep.subr.bf16.mxu0 0
    %1594 = vmatpush1.bf16.msra.mxu0 %v1574
    %1595 = vmatprep.subr.bf16.mxu0 0
    %1596 = vmatpush1.bf16.msra.mxu0 %v1575
    %1597 = vmatprep.subr.bf16.mxu0 0
    %1598 = vmatpush1.bf16.msra.mxu0 %v1576
    %1599 = vmatprep.subr.bf16.mxu0 0
    %1600 = vmatpush1.bf16.msra.mxu0 %v1577
    %1601 = vmatprep.subr.bf16.mxu0 0
    %1602 = vmatpush1.bf16.msra.mxu0 %v1578
    %1603 = vmatprep.subr.bf16.mxu0 0
    %1604 = vmatpush1.bf16.msra.mxu0 0
    %1605 = vmatprep.subr.bf16.mxu0 0
    %1606 = vmatpush1.bf16.msra.mxu0 0
    %1607 = vmatprep.subr.bf16.mxu0 0
    %1608 = vmatpush1.bf16.msra.mxu0 0
    %1609 = vmatprep.subr.bf16.mxu0 0
    %1610 = vmatpush1.bf16.msra.mxu0 0
    %1611 = vmatprep.subr.bf16.mxu0 0
    %1612 = vmatpush1.bf16.msra.mxu0 0
    %1613 = vmatprep.subr.bf16.mxu0 0
    %1614 = vmatpush1.bf16.msra.mxu0 0
    %1615 = vmatprep.subr.bf16.mxu0 0
    %1616 = vmatpush1.bf16.msra.mxu0 0
    %1617 = vmatprep.subr.bf16.mxu0 0
    %1618 = vmatpush1.bf16.msra.mxu0 0
    %1619 = vmatprep.mubr.bf16.mxu0 0
    %1620 = vmatmul.mubr.bf16.gmra.mrb[0].mxu0 %v1514
    %v1621 = vpop.f32.mrb[0].mxu0
    %v1622 = vadd.f32 %v1537, %v1621
    %v1623 = vpop.f32.mrb[0].mxu0
    %v1624 = vpop.f32.mrb[0].mxu0
    %v1625 = vadd.f32 %v1537, %v1624
    %v1626 = vpop.f32.mrb[0].mxu0
    %1627 = vmatprep.mubr.bf16.mxu0 0
    %1628 = vmatmul.mubr.bf16.gmra.mrb[0].mxu0 %v1515
    %v1629 = vpop.f32.mrb[0].mxu0
    %v1630 = vadd.f32 %v1537, %v1629
    %v1631 = vpop.f32.mrb[0].mxu0
    %v1632 = vpop.f32.mrb[0].mxu0
    %v1633 = vadd.f32 %v1537, %v1632
    %v1634 = vpop.f32.mrb[0].mxu0
    %1635 = vdwg.mxu0
    %v1636 = vadd.f32 %v132, %v1622
    %v1637 = vadd.f32 %v133, %v1625
    %v1638 = vadd.f32 %v134, %v1630
    %v1639 = vadd.f32 %v135, %v1633
    %v1640 = vld [vmem:[#allocation6] sm:$0x1]
    %v1641 = vld [vmem:[#allocation7] sm:$0x1]
    %1642 = vadd.xlane.f32.xlu0 %v1636
    %v1643 = vpop.xlane.xlu0 %1642
    %1644 = vadd.xlane.f32.xlu0 %v1637
    %v1645 = vpop.xlane.xlu0 %1644
    %1646 = vadd.xlane.f32.xlu0 %v1638
    %v1647 = vpop.xlane.xlu0 %1646
    %1648 = vadd.xlane.f32.xlu0 %v1639
    %v1649 = vpop.xlane.xlu0 %1648
    %v1650 = vmul.f32 %v1643, %v146
    %v1651 = vmul.f32 %v1645, %v146
    %v1652 = vmul.f32 %v1647, %v146
    %v1653 = vmul.f32 %v1649, %v146
    %v1654 = vsub.f32 %v1636, %v1650
    %v1655 = vsub.f32 %v1637, %v1651
    %v1656 = vsub.f32 %v1638, %v1652
    %v1657 = vsub.f32 %v1639, %v1653
    %v1658 = vmul.f32 %v1654, %v1654
    %v1659 = vmul.f32 %v1655, %v1655
    %v1660 = vmul.f32 %v1656, %v1656
    %v1661 = vmul.f32 %v1657, %v1657
    %1662 = vadd.xlane.f32.xlu0 %v1658
    %v1663 = vpop.xlane.xlu0 %1662
    %1664 = vadd.xlane.f32.xlu0 %v1659
    %v1665 = vpop.xlane.xlu0 %1664
    %1666 = vadd.xlane.f32.xlu0 %v1660
    %v1667 = vpop.xlane.xlu0 %1666
    %1668 = vadd.xlane.f32.xlu0 %v1661
    %v1669 = vpop.xlane.xlu0 %1668
    %v1670 = vmul.f32 %v1663, %v146
    %v1671 = vmul.f32 %v1665, %v146
    %v1672 = vmul.f32 %v1667, %v146
    %v1673 = vmul.f32 %v1669, %v146
    %v1674 = vadd.f32 %v1670, 1e-05
    %v1675 = vadd.f32 %v1671, 1e-05
    %v1676 = vadd.f32 %v1672, 1e-05
    %v1677 = vadd.f32 %v1673, 1e-05
    %v1678 = vrsqrt.pop %v1674
    %v1679 = vrsqrt.pop %v1675
    %v1680 = vrsqrt.pop %v1676
    %v1681 = vrsqrt.pop %v1677
    %v1682 = vmul.f32 %v1654, %v1678
    %v1683 = vmul.f32 %v1655, %v1679
    %v1684 = vmul.f32 %v1656, %v1680
    %v1685 = vmul.f32 %v1657, %v1681
    %v1687 = vlaneseq
    %v1688 = vshrl.u32 %v1687, 7
    %v1689 = vsub.s32 0, %v1688
    %v1690 = vrot.slane %v1640, %v1689
    %v1692 = vmul.f32 %v1682, %v1690
    %v1693 = vmul.f32 %v1683, %v1690
    %v1694 = vmul.f32 %v1684, %v1690
    %v1695 = vmul.f32 %v1685, %v1690
    %v1697 = vlaneseq
    %v1698 = vshrl.u32 %v1697, 7
    %v1699 = vsub.s32 0, %v1698
    %v1700 = vrot.slane %v1641, %v1699
    %v1702 = vadd.f32 %v1692, %v1700
    %v1703 = vadd.f32 %v1693, %v1700
    %v1704 = vadd.f32 %v1694, %v1700
    %v1705 = vadd.f32 %v1695, %v1700
    %v1706 = vpack.c.bf16 %v1703, %v1702
    %v1707 = vpack.c.bf16 %v1705, %v1704
    %v1708 = vld [vmem:[#allocation9] sm:$0xff]
    %v1709 = vld [vmem:[#allocation9 + $0x8] sm:$0xff]
    %v1710 = vld [vmem:[#allocation9 + $0x10] sm:$0xff]
    %v1711 = vld [vmem:[#allocation9 + $0x18] sm:$0xff]
    %v1712 = vld [vmem:[#allocation9 + $0x20] sm:$0xff]
    %v1713 = vld [vmem:[#allocation9 + $0x28] sm:$0xff]
    %v1714 = vld [vmem:[#allocation9 + $0x30] sm:$0xff]
    %v1715 = vld [vmem:[#allocation9 + $0x38] sm:$0xff]
    %v1716 = vld [vmem:[#allocation9 + $0x40] sm:$0xff]
    %v1717 = vld [vmem:[#allocation9 + $0x48] sm:$0xff]
    %v1718 = vld [vmem:[#allocation9 + $0x50] sm:$0xff]
    %v1719 = vld [vmem:[#allocation9 + $0x58] sm:$0xff]
    %v1720 = vld [vmem:[#allocation9 + $0x60] sm:$0xff]
    %v1721 = vld [vmem:[#allocation9 + $0x68] sm:$0xff]
    %v1722 = vld [vmem:[#allocation9 + $0x70] sm:$0xff]
    %v1723 = vld [vmem:[#allocation9 + $0x78] sm:$0xff]
    %v1724 = vld [vmem:[#allocation9 + $0x80] sm:$0xff]
    %v1725 = vld [vmem:[#allocation9 + $0x88] sm:$0xff]
    %v1726 = vld [vmem:[#allocation9 + $0x90] sm:$0xff]
    %v1727 = vld [vmem:[#allocation9 + $0x98] sm:$0xff]
    %v1728 = vld [vmem:[#allocation9 + $0xa0] sm:$0xff]
    %v1729 = vld [vmem:[#allocation9 + $0xa8] sm:$0xff]
    %v1730 = vld [vmem:[#allocation9 + $0xb0] sm:$0xff]
    %v1731 = vld [vmem:[#allocation9 + $0xb8] sm:$0xff]
    %v1732 = vld [vmem:[#allocation9 + $0xc0] sm:$0xff]
    %v1733 = vld [vmem:[#allocation9 + $0xc8] sm:$0xff]
    %v1734 = vld [vmem:[#allocation9 + $0xd0] sm:$0xff]
    %v1735 = vld [vmem:[#allocation9 + $0xd8] sm:$0xff]
    %v1736 = vld [vmem:[#allocation9 + $0xe0] sm:$0xff]
    %v1737 = vld [vmem:[#allocation9 + $0xe8] sm:$0xff]
    %v1738 = vld [vmem:[#allocation9 + $0xf0] sm:$0xff]
    %v1739 = vld [vmem:[#allocation9 + $0xf8] sm:$0xff]
    %v1740 = vld [vmem:[%s10] sm:$0xf]
    %v1742 = vlaneseq
    %v1743 = vshrl.u32 %v1742, 7
    %v1744 = vsub.s32 0, %v1743
    %v1745 = vrot.slane %v1740, %v1744
    %v1746 = vlaneseq
    %v1747 = vshrl.u32 %v1746, 7
    %v1748 = vsub.s32 1, %v1747
    %v1749 = vrot.slane %v1740, %v1748
    %v1750 = vlaneseq
    %v1751 = vshrl.u32 %v1750, 7
    %v1752 = vsub.s32 2, %v1751
    %v1753 = vrot.slane %v1740, %v1752
    %v1754 = vlaneseq
    %v1755 = vshrl.u32 %v1754, 7
    %v1756 = vsub.s32 3, %v1755
    %v1757 = vrot.slane %v1740, %v1756
    %v1794 = vunpack.c.l.b16 %v1708
    %v1795 = vunpack.c.h.b16 %v1708
    %v1796 = vunpack.c.l.b16 %v1709
    %v1797 = vunpack.c.h.b16 %v1709
    %v1798 = vunpack.c.l.b16 %v1710
    %v1799 = vunpack.c.h.b16 %v1710
    %v1800 = vunpack.c.l.b16 %v1711
    %v1801 = vunpack.c.h.b16 %v1711
    %v1802 = vunpack.c.l.b16 %v1712
    %v1803 = vunpack.c.h.b16 %v1712
    %v1804 = vunpack.c.l.b16 %v1713
    %v1805 = vunpack.c.h.b16 %v1713
    %v1806 = vunpack.c.l.b16 %v1714
    %v1807 = vunpack.c.h.b16 %v1714
    %v1808 = vunpack.c.l.b16 %v1715
    %v1809 = vunpack.c.h.b16 %v1715
    %v1810 = vunpack.c.l.b16 %v1716
    %v1811 = vunpack.c.h.b16 %v1716
    %v1812 = vunpack.c.l.b16 %v1717
    %v1813 = vunpack.c.h.b16 %v1717
    %v1814 = vunpack.c.l.b16 %v1718
    %v1815 = vunpack.c.h.b16 %v1718
    %v1816 = vunpack.c.l.b16 %v1719
    %v1817 = vunpack.c.h.b16 %v1719
    %v1818 = vunpack.c.l.b16 %v1720
    %v1819 = vunpack.c.h.b16 %v1720
    %v1820 = vunpack.c.l.b16 %v1721
    %v1821 = vunpack.c.h.b16 %v1721
    %v1822 = vunpack.c.l.b16 %v1722
    %v1823 = vunpack.c.h.b16 %v1722
    %v1824 = vunpack.c.l.b16 %v1723
    %v1825 = vunpack.c.h.b16 %v1723
    %v1826 = vunpack.c.l.b16 %v1724
    %v1827 = vunpack.c.h.b16 %v1724
    %v1828 = vunpack.c.l.b16 %v1725
    %v1829 = vunpack.c.h.b16 %v1725
    %v1830 = vunpack.c.l.b16 %v1726
    %v1831 = vunpack.c.h.b16 %v1726
    %v1832 = vunpack.c.l.b16 %v1727
    %v1833 = vunpack.c.h.b16 %v1727
    %v1834 = vunpack.c.l.b16 %v1728
    %v1835 = vunpack.c.h.b16 %v1728
    %v1836 = vunpack.c.l.b16 %v1729
    %v1837 = vunpack.c.h.b16 %v1729
    %v1838 = vunpack.c.l.b16 %v1730
    %v1839 = vunpack.c.h.b16 %v1730
    %v1840 = vunpack.c.l.b16 %v1731
    %v1841 = vunpack.c.h.b16 %v1731
    %v1842 = vunpack.c.l.b16 %v1732
    %v1843 = vunpack.c.h.b16 %v1732
    %v1844 = vunpack.c.l.b16 %v1733
    %v1845 = vunpack.c.h.b16 %v1733
    %v1846 = vunpack.c.l.b16 %v1734
    %v1847 = vunpack.c.h.b16 %v1734
    %v1848 = vunpack.c.l.b16 %v1735
    %v1849 = vunpack.c.h.b16 %v1735
    %v1850 = vunpack.c.l.b16 %v1736
    %v1851 = vunpack.c.h.b16 %v1736
    %v1852 = vunpack.c.l.b16 %v1737
    %v1853 = vunpack.c.h.b16 %v1737
    %v1854 = vunpack.c.l.b16 %v1738
    %v1855 = vunpack.c.h.b16 %v1738
    %v1856 = vunpack.c.l.b16 %v1739
    %v1857 = vunpack.c.h.b16 %v1739
    %v1858 = vpack.c.b16 %v1798, %v1794
    %v1859 = vpack.c.b16 %v1799, %v1795
    %v1860 = vpack.c.b16 %v1800, %v1796
    %v1861 = vpack.c.b16 %v1801, %v1797
    %v1862 = vpack.c.b16 %v1806, %v1802
    %v1863 = vpack.c.b16 %v1807, %v1803
    %v1864 = vpack.c.b16 %v1808, %v1804
    %v1865 = vpack.c.b16 %v1809, %v1805
    %v1866 = vpack.c.b16 %v1814, %v1810
    %v1867 = vpack.c.b16 %v1815, %v1811
    %v1868 = vpack.c.b16 %v1816, %v1812
    %v1869 = vpack.c.b16 %v1817, %v1813
    %v1870 = vpack.c.b16 %v1822, %v1818
    %v1871 = vpack.c.b16 %v1823, %v1819
    %v1872 = vpack.c.b16 %v1824, %v1820
    %v1873 = vpack.c.b16 %v1825, %v1821
    %v1874 = vpack.c.b16 %v1830, %v1826
    %v1875 = vpack.c.b16 %v1831, %v1827
    %v1876 = vpack.c.b16 %v1832, %v1828
    %v1877 = vpack.c.b16 %v1833, %v1829
    %v1878 = vpack.c.b16 %v1838, %v1834
    %v1879 = vpack.c.b16 %v1839, %v1835
    %v1880 = vpack.c.b16 %v1840, %v1836
    %v1881 = vpack.c.b16 %v1841, %v1837
    %v1882 = vpack.c.b16 %v1846, %v1842
    %v1883 = vpack.c.b16 %v1847, %v1843
    %v1884 = vpack.c.b16 %v1848, %v1844
    %v1885 = vpack.c.b16 %v1849, %v1845
    %v1886 = vpack.c.b16 %v1854, %v1850
    %v1887 = vpack.c.b16 %v1855, %v1851
    %v1888 = vpack.c.b16 %v1856, %v1852
    %v1889 = vpack.c.b16 %v1857, %v1853
    %1922 = vmatprep.subr.bf16.mxu0 %v1859
    %1923 = vmatpush1.bf16.msra.mxu0 %v1858
    %1924 = vmatprep.subr.bf16.mxu0 %v1863
    %1925 = vmatpush1.bf16.msra.mxu0 %v1862
    %1926 = vmatprep.subr.bf16.mxu0 %v1867
    %1927 = vmatpush1.bf16.msra.mxu0 %v1866
    %1928 = vmatprep.subr.bf16.mxu0 %v1871
    %1929 = vmatpush1.bf16.msra.mxu0 %v1870
    %1930 = vmatprep.subr.bf16.mxu0 %v1875
    %1931 = vmatpush1.bf16.msra.mxu0 %v1874
    %1932 = vmatprep.subr.bf16.mxu0 %v1879
    %1933 = vmatpush1.bf16.msra.mxu0 %v1878
    %1934 = vmatprep.subr.bf16.mxu0 %v1883
    %1935 = vmatpush1.bf16.msra.mxu0 %v1882
    %1936 = vmatprep.subr.bf16.mxu0 %v1887
    %1937 = vmatpush1.bf16.msra.mxu0 %v1886
    %1938 = vmatprep.subr.bf16.mxu0 0
    %1939 = vmatpush1.bf16.msra.mxu0 0
    %1940 = vmatprep.subr.bf16.mxu0 0
    %1941 = vmatpush1.bf16.msra.mxu0 0
    %1942 = vmatprep.subr.bf16.mxu0 0
    %1943 = vmatpush1.bf16.msra.mxu0 0
    %1944 = vmatprep.subr.bf16.mxu0 0
    %1945 = vmatpush1.bf16.msra.mxu0 0
    %1946 = vmatprep.subr.bf16.mxu0 0
    %1947 = vmatpush1.bf16.msra.mxu0 0
    %1948 = vmatprep.subr.bf16.mxu0 0
    %1949 = vmatpush1.bf16.msra.mxu0 0
    %1950 = vmatprep.subr.bf16.mxu0 0
    %1951 = vmatpush1.bf16.msra.mxu0 0
    %1952 = vmatprep.subr.bf16.mxu0 0
    %1953 = vmatpush1.bf16.msra.mxu0 0
    %1954 = vmatprep.mubr.bf16.mxu0 0
    %1955 = vmatmul.mubr.bf16.gmra.mrb[0].mxu0 %v1706
    %v1956 = vpop.f32.mrb[0].mxu0
    %v1957 = vadd.f32 %v1745, %v1956
    %v1958 = vpop.f32.mrb[0].mxu0
    %v1959 = vadd.f32 %v1749, %v1958
    %v1960 = vpop.f32.mrb[0].mxu0
    %v1961 = vadd.f32 %v1745, %v1960
    %v1962 = vpop.f32.mrb[0].mxu0
    %v1963 = vadd.f32 %v1749, %v1962
    %1964 = vmatprep.mubr.bf16.mxu0 0
    %1965 = vmatmul.mubr.bf16.gmra.mrb[0].mxu0 %v1707
    %v1966 = vpop.f32.mrb[0].mxu0
    %v1967 = vadd.f32 %v1745, %v1966
    %v1968 = vpop.f32.mrb[0].mxu0
    %v1969 = vadd.f32 %v1749, %v1968
    %v1970 = vpop.f32.mrb[0].mxu0
    %v1971 = vadd.f32 %v1745, %v1970
    %v1972 = vpop.f32.mrb[0].mxu0
    %v1973 = vadd.f32 %v1749, %v1972
    %1974 = vdwg.mxu0
    %1975 = vmatprep.subr.bf16.mxu0 %v1861
    %1976 = vmatpush1.bf16.msra.mxu0 %v1860
    %1977 = vmatprep.subr.bf16.mxu0 %v1865
    %1978 = vmatpush1.bf16.msra.mxu0 %v1864
    %1979 = vmatprep.subr.bf16.mxu0 %v1869
    %1980 = vmatpush1.bf16.msra.mxu0 %v1868
    %1981 = vmatprep.subr.bf16.mxu0 %v1873
    %1982 = vmatpush1.bf16.msra.mxu0 %v1872
    %1983 = vmatprep.subr.bf16.mxu0 %v1877
    %1984 = vmatpush1.bf16.msra.mxu0 %v1876
    %1985 = vmatprep.subr.bf16.mxu0 %v1881
    %1986 = vmatpush1.bf16.msra.mxu0 %v1880
    %1987 = vmatprep.subr.bf16.mxu0 %v1885
    %1988 = vmatpush1.bf16.msra.mxu0 %v1884
    %1989 = vmatprep.subr.bf16.mxu0 %v1889
    %1990 = vmatpush1.bf16.msra.mxu0 %v1888
    %1991 = vmatprep.subr.bf16.mxu0 0
    %1992 = vmatpush1.bf16.msra.mxu0 0
    %1993 = vmatprep.subr.bf16.mxu0 0
    %1994 = vmatpush1.bf16.msra.mxu0 0
    %1995 = vmatprep.subr.bf16.mxu0 0
    %1996 = vmatpush1.bf16.msra.mxu0 0
    %1997 = vmatprep.subr.bf16.mxu0 0
    %1998 = vmatpush1.bf16.msra.mxu0 0
    %1999 = vmatprep.subr.bf16.mxu0 0
    %2000 = vmatpush1.bf16.msra.mxu0 0
    %2001 = vmatprep.subr.bf16.mxu0 0
    %2002 = vmatpush1.bf16.msra.mxu0 0
    %2003 = vmatprep.subr.bf16.mxu0 0
    %2004 = vmatpush1.bf16.msra.mxu0 0
    %2005 = vmatprep.subr.bf16.mxu0 0
    %2006 = vmatpush1.bf16.msra.mxu0 0
    %2007 = vmatprep.mubr.bf16.mxu0 0
    %2008 = vmatmul.mubr.bf16.gmra.mrb[0].mxu0 %v1706
    %v2009 = vpop.f32.mrb[0].mxu0
    %v2010 = vadd.f32 %v1753, %v2009
    %v2011 = vpop.f32.mrb[0].mxu0
    %v2012 = vadd.f32 %v1757, %v2011
    %v2013 = vpop.f32.mrb[0].mxu0
    %v2014 = vadd.f32 %v1753, %v2013
    %v2015 = vpop.f32.mrb[0].mxu0
    %v2016 = vadd.f32 %v1757, %v2015
    %2017 = vmatprep.mubr.bf16.mxu0 0
    %2018 = vmatmul.mubr.bf16.gmra.mrb[0].mxu0 %v1707
    %v2019 = vpop.f32.mrb[0].mxu0
    %v2020 = vadd.f32 %v1753, %v2019
    %v2021 = vpop.f32.mrb[0].mxu0
    %v2022 = vadd.f32 %v1757, %v2021
    %v2023 = vpop.f32.mrb[0].mxu0
    %v2024 = vadd.f32 %v1753, %v2023
    %v2025 = vpop.f32.mrb[0].mxu0
    %v2026 = vadd.f32 %v1757, %v2025
    %2027 = vdwg.mxu0
    %v2028 = vmul.f32 %v1957, 1.702
    %v2029 = vmul.f32 %v1959, 1.702
    %v2030 = vmul.f32 %v2010, 1.702
    %v2031 = vmul.f32 %v2012, 1.702
    %v2032 = vmul.f32 %v1961, 1.702
    %v2033 = vmul.f32 %v1963, 1.702
    %v2034 = vmul.f32 %v2014, 1.702
    %v2035 = vmul.f32 %v2016, 1.702
    %v2036 = vmul.f32 %v1967, 1.702
    %v2037 = vmul.f32 %v1969, 1.702
    %v2038 = vmul.f32 %v2020, 1.702
    %v2039 = vmul.f32 %v2022, 1.702
    %v2040 = vmul.f32 %v1971, 1.702
    %v2041 = vmul.f32 %v1973, 1.702
    %v2042 = vmul.f32 %v2024, 1.702
    %v2043 = vmul.f32 %v2026, 1.702
    %v2044 = vxor.u32 %v2028, 2147483648
    %v2045 = vxor.u32 %v2029, 2147483648
    %v2046 = vxor.u32 %v2030, 2147483648
    %v2047 = vxor.u32 %v2031, 2147483648
    %v2048 = vxor.u32 %v2032, 2147483648
    %v2049 = vxor.u32 %v2033, 2147483648
    %v2050 = vxor.u32 %v2034, 2147483648
    %v2051 = vxor.u32 %v2035, 2147483648
    %v2052 = vxor.u32 %v2036, 2147483648
    %v2053 = vxor.u32 %v2037, 2147483648
    %v2054 = vxor.u32 %v2038, 2147483648
    %v2055 = vxor.u32 %v2039, 2147483648
    %v2056 = vxor.u32 %v2040, 2147483648
    %v2057 = vxor.u32 %v2041, 2147483648
    %v2058 = vxor.u32 %v2042, 2147483648
    %v2059 = vxor.u32 %v2043, 2147483648
    %v2060 = vmul.f32 %v2044, 1.442695
    %v2061 = vpow.pop %v2060
    %v2062 = vmul.f32 %v2045, 1.442695
    %v2063 = vpow.pop %v2062
    %v2064 = vmul.f32 %v2046, 1.442695
    %v2065 = vpow.pop %v2064
    %v2066 = vmul.f32 %v2047, 1.442695
    %v2067 = vpow.pop %v2066
    %v2068 = vmul.f32 %v2048, 1.442695
    %v2069 = vpow.pop %v2068
    %v2070 = vmul.f32 %v2049, 1.442695
    %v2071 = vpow.pop %v2070
    %v2072 = vmul.f32 %v2050, 1.442695
    %v2073 = vpow.pop %v2072
    %v2074 = vmul.f32 %v2051, 1.442695
    %v2075 = vpow.pop %v2074
    %v2076 = vmul.f32 %v2052, 1.442695
    %v2077 = vpow.pop %v2076
    %v2078 = vmul.f32 %v2053, 1.442695
    %v2079 = vpow.pop %v2078
    %v2080 = vmul.f32 %v2054, 1.442695
    %v2081 = vpow.pop %v2080
    %v2082 = vmul.f32 %v2055, 1.442695
    %v2083 = vpow.pop %v2082
    %v2084 = vmul.f32 %v2056, 1.442695
    %v2085 = vpow.pop %v2084
    %v2086 = vmul.f32 %v2057, 1.442695
    %v2087 = vpow.pop %v2086
    %v2088 = vmul.f32 %v2058, 1.442695
    %v2089 = vpow.pop %v2088
    %v2090 = vmul.f32 %v2059, 1.442695
    %v2091 = vpow.pop %v2090
    %v2092 = vadd.f32 %v2061, 1.0
    %v2093 = vadd.f32 %v2063, 1.0
    %v2094 = vadd.f32 %v2065, 1.0
    %v2095 = vadd.f32 %v2067, 1.0
    %v2096 = vadd.f32 %v2069, 1.0
    %v2097 = vadd.f32 %v2071, 1.0
    %v2098 = vadd.f32 %v2073, 1.0
    %v2099 = vadd.f32 %v2075, 1.0
    %v2100 = vadd.f32 %v2077, 1.0
    %v2101 = vadd.f32 %v2079, 1.0
    %v2102 = vadd.f32 %v2081, 1.0
    %v2103 = vadd.f32 %v2083, 1.0
    %v2104 = vadd.f32 %v2085, 1.0
    %v2105 = vadd.f32 %v2087, 1.0
    %v2106 = vadd.f32 %v2089, 1.0
    %v2107 = vadd.f32 %v2091, 1.0
    %v2108 = vrcp.pop %v2092
    %v2109 = vmul.f32 1.0, %v2108
    %v2110 = vrcp.pop %v2093
    %v2111 = vmul.f32 1.0, %v2110
    %v2112 = vrcp.pop %v2094
    %v2113 = vmul.f32 1.0, %v2112
    %v2114 = vrcp.pop %v2095
    %v2115 = vmul.f32 1.0, %v2114
    %v2116 = vrcp.pop %v2096
    %v2117 = vmul.f32 1.0, %v2116
    %v2118 = vrcp.pop %v2097
    %v2119 = vmul.f32 1.0, %v2118
    %v2120 = vrcp.pop %v2098
    %v2121 = vmul.f32 1.0, %v2120
    %v2122 = vrcp.pop %v2099
    %v2123 = vmul.f32 1.0, %v2122
    %v2124 = vrcp.pop %v2100
    %v2125 = vmul.f32 1.0, %v2124
    %v2126 = vrcp.pop %v2101
    %v2127 = vmul.f32 1.0, %v2126
    %v2128 = vrcp.pop %v2102
    %v2129 = vmul.f32 1.0, %v2128
    %v2130 = vrcp.pop %v2103
    %v2131 = vmul.f32 1.0, %v2130
    %v2132 = vrcp.pop %v2104
    %v2133 = vmul.f32 1.0, %v2132
    %v2134 = vrcp.pop %v2105
    %v2135 = vmul.f32 1.0, %v2134
    %v2136 = vrcp.pop %v2106
    %v2137 = vmul.f32 1.0, %v2136
    %v2138 = vrcp.pop %v2107
    %v2139 = vmul.f32 1.0, %v2138
    %v2140 = vmul.f32 %v1957, %v2109
    %v2141 = vmul.f32 %v1959, %v2111
    %v2142 = vmul.f32 %v2010, %v2113
    %v2143 = vmul.f32 %v2012, %v2115
    %v2144 = vmul.f32 %v1961, %v2117
    %v2145 = vmul.f32 %v1963, %v2119
    %v2146 = vmul.f32 %v2014, %v2121
    %v2147 = vmul.f32 %v2016, %v2123
    %v2148 = vmul.f32 %v1967, %v2125
    %v2149 = vmul.f32 %v1969, %v2127
    %v2150 = vmul.f32 %v2020, %v2129
    %v2151 = vmul.f32 %v2022, %v2131
    %v2152 = vmul.f32 %v1971, %v2133
    %v2153 = vmul.f32 %v1973, %v2135
    %v2154 = vmul.f32 %v2024, %v2137
    %v2155 = vmul.f32 %v2026, %v2139
    %v2156 = vpack.c.bf16 %v2144, %v2140
    %v2157 = vpack.c.bf16 %v2145, %v2141
    %v2158 = vpack.c.bf16 %v2146, %v2142
    %v2159 = vpack.c.bf16 %v2147, %v2143
    %v2160 = vpack.c.bf16 %v2152, %v2148
    %v2161 = vpack.c.bf16 %v2153, %v2149
    %v2162 = vpack.c.bf16 %v2154, %v2150
    %v2163 = vpack.c.bf16 %v2155, %v2151
    %v2164 = vld [vmem:[#allocation10] sm:$0xf]
    %v2165 = vld [vmem:[#allocation10 + $0x4] sm:$0xf]
    %v2166 = vld [vmem:[#allocation10 + $0x8] sm:$0xf]
    %v2167 = vld [vmem:[#allocation10 + $0xc] sm:$0xf]
    %v2168 = vld [vmem:[#allocation10 + $0x10] sm:$0xf]
    %v2169 = vld [vmem:[#allocation10 + $0x14] sm:$0xf]
    %v2170 = vld [vmem:[#allocation10 + $0x18] sm:$0xf]
    %v2171 = vld [vmem:[#allocation10 + $0x1c] sm:$0xf]
    %v2172 = vld [vmem:[#allocation10 + $0x20] sm:$0xf]
    %v2173 = vld [vmem:[#allocation10 + $0x24] sm:$0xf]
    %v2174 = vld [vmem:[#allocation10 + $0x28] sm:$0xf]
    %v2175 = vld [vmem:[#allocation10 + $0x2c] sm:$0xf]
    %v2176 = vld [vmem:[#allocation10 + $0x30] sm:$0xf]
    %v2177 = vld [vmem:[#allocation10 + $0x34] sm:$0xf]
    %v2178 = vld [vmem:[#allocation10 + $0x38] sm:$0xf]
    %v2179 = vld [vmem:[#allocation10 + $0x3c] sm:$0xf]
    %v2180 = vld [vmem:[#allocation10 + $0x40] sm:$0xf]
    %v2181 = vld [vmem:[#allocation10 + $0x44] sm:$0xf]
    %v2182 = vld [vmem:[#allocation10 + $0x48] sm:$0xf]
    %v2183 = vld [vmem:[#allocation10 + $0x4c] sm:$0xf]
    %v2184 = vld [vmem:[#allocation10 + $0x50] sm:$0xf]
    %v2185 = vld [vmem:[#allocation10 + $0x54] sm:$0xf]
    %v2186 = vld [vmem:[#allocation10 + $0x58] sm:$0xf]
    %v2187 = vld [vmem:[#allocation10 + $0x5c] sm:$0xf]
    %v2188 = vld [vmem:[#allocation10 + $0x60] sm:$0xf]
    %v2189 = vld [vmem:[#allocation10 + $0x64] sm:$0xf]
    %v2190 = vld [vmem:[#allocation10 + $0x68] sm:$0xf]
    %v2191 = vld [vmem:[#allocation10 + $0x6c] sm:$0xf]
    %v2192 = vld [vmem:[#allocation10 + $0x70] sm:$0xf]
    %v2193 = vld [vmem:[#allocation10 + $0x74] sm:$0xf]
    %v2194 = vld [vmem:[#allocation10 + $0x78] sm:$0xf]
    %v2195 = vld [vmem:[#allocation10 + $0x7c] sm:$0xf]
    %v2196 = vld [vmem:[#allocation10 + $0x80] sm:$0xf]
    %v2197 = vld [vmem:[#allocation10 + $0x84] sm:$0xf]
    %v2198 = vld [vmem:[#allocation10 + $0x88] sm:$0xf]
    %v2199 = vld [vmem:[#allocation10 + $0x8c] sm:$0xf]
    %v2200 = vld [vmem:[#allocation10 + $0x90] sm:$0xf]
    %v2201 = vld [vmem:[#allocation10 + $0x94] sm:$0xf]
    %v2202 = vld [vmem:[#allocation10 + $0x98] sm:$0xf]
    %v2203 = vld [vmem:[#allocation10 + $0x9c] sm:$0xf]
    %v2204 = vld [vmem:[#allocation10 + $0xa0] sm:$0xf]
    %v2205 = vld [vmem:[#allocation10 + $0xa4] sm:$0xf]
    %v2206 = vld [vmem:[#allocation10 + $0xa8] sm:$0xf]
    %v2207 = vld [vmem:[#allocation10 + $0xac] sm:$0xf]
    %v2208 = vld [vmem:[#allocation10 + $0xb0] sm:$0xf]
    %v2209 = vld [vmem:[#allocation10 + $0xb4] sm:$0xf]
    %v2210 = vld [vmem:[#allocation10 + $0xb8] sm:$0xf]
    %v2211 = vld [vmem:[#allocation10 + $0xbc] sm:$0xf]
    %v2212 = vld [vmem:[#allocation10 + $0xc0] sm:$0xf]
    %v2213 = vld [vmem:[#allocation10 + $0xc4] sm:$0xf]
    %v2214 = vld [vmem:[#allocation10 + $0xc8] sm:$0xf]
    %v2215 = vld [vmem:[#allocation10 + $0xcc] sm:$0xf]
    %v2216 = vld [vmem:[#allocation10 + $0xd0] sm:$0xf]
    %v2217 = vld [vmem:[#allocation10 + $0xd4] sm:$0xf]
    %v2218 = vld [vmem:[#allocation10 + $0xd8] sm:$0xf]
    %v2219 = vld [vmem:[#allocation10 + $0xdc] sm:$0xf]
    %v2220 = vld [vmem:[#allocation10 + $0xe0] sm:$0xf]
    %v2221 = vld [vmem:[#allocation10 + $0xe4] sm:$0xf]
    %v2222 = vld [vmem:[#allocation10 + $0xe8] sm:$0xf]
    %v2223 = vld [vmem:[#allocation10 + $0xec] sm:$0xf]
    %v2224 = vld [vmem:[#allocation10 + $0xf0] sm:$0xf]
    %v2225 = vld [vmem:[#allocation10 + $0xf4] sm:$0xf]
    %v2226 = vld [vmem:[#allocation10 + $0xf8] sm:$0xf]
    %v2227 = vld [vmem:[#allocation10 + $0xfc] sm:$0xf]
    %v2228 = vld [vmem:[#allocation12] sm:$0x1]
    %v2230 = vlaneseq
    %v2231 = vshrl.u32 %v2230, 7
    %v2232 = vsub.s32 0, %v2231
    %v2233 = vrot.slane %v2228, %v2232
    %v2299 = vunpack.c.l.b16 %v2164
    %v2300 = vunpack.c.l.b16 %v2165
    %v2301 = vunpack.c.l.b16 %v2166
    %v2302 = vunpack.c.l.b16 %v2167
    %v2303 = vunpack.c.l.b16 %v2168
    %v2304 = vunpack.c.l.b16 %v2169
    %v2305 = vunpack.c.l.b16 %v2170
    %v2306 = vunpack.c.l.b16 %v2171
    %v2307 = vunpack.c.l.b16 %v2172
    %v2308 = vunpack.c.l.b16 %v2173
    %v2309 = vunpack.c.l.b16 %v2174
    %v2310 = vunpack.c.l.b16 %v2175
    %v2311 = vunpack.c.l.b16 %v2176
    %v2312 = vunpack.c.l.b16 %v2177
    %v2313 = vunpack.c.l.b16 %v2178
    %v2314 = vunpack.c.l.b16 %v2179
    %v2315 = vunpack.c.l.b16 %v2180
    %v2316 = vunpack.c.l.b16 %v2181
    %v2317 = vunpack.c.l.b16 %v2182
    %v2318 = vunpack.c.l.b16 %v2183
    %v2319 = vunpack.c.l.b16 %v2184
    %v2320 = vunpack.c.l.b16 %v2185
    %v2321 = vunpack.c.l.b16 %v2186
    %v2322 = vunpack.c.l.b16 %v2187
    %v2323 = vunpack.c.l.b16 %v2188
    %v2324 = vunpack.c.l.b16 %v2189
    %v2325 = vunpack.c.l.b16 %v2190
    %v2326 = vunpack.c.l.b16 %v2191
    %v2327 = vunpack.c.l.b16 %v2192
    %v2328 = vunpack.c.l.b16 %v2193
    %v2329 = vunpack.c.l.b16 %v2194
    %v2330 = vunpack.c.l.b16 %v2195
    %v2331 = vunpack.c.l.b16 %v2196
    %v2332 = vunpack.c.l.b16 %v2197
    %v2333 = vunpack.c.l.b16 %v2198
    %v2334 = vunpack.c.l.b16 %v2199
    %v2335 = vunpack.c.l.b16 %v2200
    %v2336 = vunpack.c.l.b16 %v2201
    %v2337 = vunpack.c.l.b16 %v2202
    %v2338 = vunpack.c.l.b16 %v2203
    %v2339 = vunpack.c.l.b16 %v2204
    %v2340 = vunpack.c.l.b16 %v2205
    %v2341 = vunpack.c.l.b16 %v2206
    %v2342 = vunpack.c.l.b16 %v2207
    %v2343 = vunpack.c.l.b16 %v2208
    %v2344 = vunpack.c.l.b16 %v2209
    %v2345 = vunpack.c.l.b16 %v2210
    %v2346 = vunpack.c.l.b16 %v2211
    %v2347 = vunpack.c.l.b16 %v2212
    %v2348 = vunpack.c.l.b16 %v2213
    %v2349 = vunpack.c.l.b16 %v2214
    %v2350 = vunpack.c.l.b16 %v2215
    %v2351 = vunpack.c.l.b16 %v2216
    %v2352 = vunpack.c.l.b16 %v2217
    %v2353 = vunpack.c.l.b16 %v2218
    %v2354 = vunpack.c.l.b16 %v2219
    %v2355 = vunpack.c.l.b16 %v2220
    %v2356 = vunpack.c.l.b16 %v2221
    %v2357 = vunpack.c.l.b16 %v2222
    %v2358 = vunpack.c.l.b16 %v2223
    %v2359 = vunpack.c.l.b16 %v2224
    %v2360 = vunpack.c.l.b16 %v2225
    %v2361 = vunpack.c.l.b16 %v2226
    %v2362 = vunpack.c.l.b16 %v2227
    %v2363 = vpack.c.b16 %v2300, %v2299
    %v2364 = vpack.c.b16 %v2302, %v2301
    %v2365 = vpack.c.b16 %v2304, %v2303
    %v2366 = vpack.c.b16 %v2306, %v2305
    %v2367 = vpack.c.b16 %v2308, %v2307
    %v2368 = vpack.c.b16 %v2310, %v2309
    %v2369 = vpack.c.b16 %v2312, %v2311
    %v2370 = vpack.c.b16 %v2314, %v2313
    %v2371 = vpack.c.b16 %v2316, %v2315
    %v2372 = vpack.c.b16 %v2318, %v2317
    %v2373 = vpack.c.b16 %v2320, %v2319
    %v2374 = vpack.c.b16 %v2322, %v2321
    %v2375 = vpack.c.b16 %v2324, %v2323
    %v2376 = vpack.c.b16 %v2326, %v2325
    %v2377 = vpack.c.b16 %v2328, %v2327
    %v2378 = vpack.c.b16 %v2330, %v2329
    %v2379 = vpack.c.b16 %v2332, %v2331
    %v2380 = vpack.c.b16 %v2334, %v2333
    %v2381 = vpack.c.b16 %v2336, %v2335
    %v2382 = vpack.c.b16 %v2338, %v2337
    %v2383 = vpack.c.b16 %v2340, %v2339
    %v2384 = vpack.c.b16 %v2342, %v2341
    %v2385 = vpack.c.b16 %v2344, %v2343
    %v2386 = vpack.c.b16 %v2346, %v2345
    %v2387 = vpack.c.b16 %v2348, %v2347
    %v2388 = vpack.c.b16 %v2350, %v2349
    %v2389 = vpack.c.b16 %v2352, %v2351
    %v2390 = vpack.c.b16 %v2354, %v2353
    %v2391 = vpack.c.b16 %v2356, %v2355
    %v2392 = vpack.c.b16 %v2358, %v2357
    %v2393 = vpack.c.b16 %v2360, %v2359
    %v2394 = vpack.c.b16 %v2362, %v2361
    %2427 = vmatprep.subr.bf16.mxu0 0
    %2428 = vmatpush1.bf16.msra.mxu0 %v2363
    %2429 = vmatprep.subr.bf16.mxu0 0
    %2430 = vmatpush1.bf16.msra.mxu0 %v2364
    %2431 = vmatprep.subr.bf16.mxu0 0
    %2432 = vmatpush1.bf16.msra.mxu0 %v2365
    %2433 = vmatprep.subr.bf16.mxu0 0
    %2434 = vmatpush1.bf16.msra.mxu0 %v2366
    %2435 = vmatprep.subr.bf16.mxu0 0
    %2436 = vmatpush1.bf16.msra.mxu0 %v2367
    %2437 = vmatprep.subr.bf16.mxu0 0
    %2438 = vmatpush1.bf16.msra.mxu0 %v2368
    %2439 = vmatprep.subr.bf16.mxu0 0
    %2440 = vmatpush1.bf16.msra.mxu0 %v2369
    %2441 = vmatprep.subr.bf16.mxu0 0
    %2442 = vmatpush1.bf16.msra.mxu0 %v2370
    %2443 = vmatprep.subr.bf16.mxu0 0
    %2444 = vmatpush1.bf16.msra.mxu0 %v2371
    %2445 = vmatprep.subr.bf16.mxu0 0
    %2446 = vmatpush1.bf16.msra.mxu0 %v2372
    %2447 = vmatprep.subr.bf16.mxu0 0
    %2448 = vmatpush1.bf16.msra.mxu0 %v2373
    %2449 = vmatprep.subr.bf16.mxu0 0
    %2450 = vmatpush1.bf16.msra.mxu0 %v2374
    %2451 = vmatprep.subr.bf16.mxu0 0
    %2452 = vmatpush1.bf16.msra.mxu0 %v2375
    %2453 = vmatprep.subr.bf16.mxu0 0
    %2454 = vmatpush1.bf16.msra.mxu0 %v2376
    %2455 = vmatprep.subr.bf16.mxu0 0
    %2456 = vmatpush1.bf16.msra.mxu0 %v2377
    %2457 = vmatprep.subr.bf16.mxu0 0
    %2458 = vmatpush1.bf16.msra.mxu0 %v2378
    %2459 = vmatprep.mubr.bf16.mxu0 %v2157
    %2460 = vmatmul.mubr.bf16.gmra.mrb[0].mxu0 %v2156
    %v2461 = vpop.f32.mrb[0].mxu0
    %v2462 = vadd.f32 %v2233, %v2461
    %v2463 = vpop.f32.mrb[0].mxu0
    %v2464 = vpop.f32.mrb[0].mxu0
    %v2465 = vadd.f32 %v2233, %v2464
    %v2466 = vpop.f32.mrb[0].mxu0
    %2467 = vmatprep.mubr.bf16.mxu0 %v2161
    %2468 = vmatmul.mubr.bf16.gmra.mrb[0].mxu0 %v2160
    %v2469 = vpop.f32.mrb[0].mxu0
    %v2470 = vadd.f32 %v2233, %v2469
    %v2471 = vpop.f32.mrb[0].mxu0
    %v2472 = vpop.f32.mrb[0].mxu0
    %v2473 = vadd.f32 %v2233, %v2472
    %v2474 = vpop.f32.mrb[0].mxu0
    %2475 = vdwg.mxu0
    %2476 = vmatprep.subr.bf16.mxu0 0
    %2477 = vmatpush1.bf16.msra.mxu0 %v2379
    %2478 = vmatprep.subr.bf16.mxu0 0
    %2479 = vmatpush1.bf16.msra.mxu0 %v2380
    %2480 = vmatprep.subr.bf16.mxu0 0
    %2481 = vmatpush1.bf16.msra.mxu0 %v2381
    %2482 = vmatprep.subr.bf16.mxu0 0
    %2483 = vmatpush1.bf16.msra.mxu0 %v2382
    %2484 = vmatprep.subr.bf16.mxu0 0
    %2485 = vmatpush1.bf16.msra.mxu0 %v2383
    %2486 = vmatprep.subr.bf16.mxu0 0
    %2487 = vmatpush1.bf16.msra.mxu0 %v2384
    %2488 = vmatprep.subr.bf16.mxu0 0
    %2489 = vmatpush1.bf16.msra.mxu0 %v2385
    %2490 = vmatprep.subr.bf16.mxu0 0
    %2491 = vmatpush1.bf16.msra.mxu0 %v2386
    %2492 = vmatprep.subr.bf16.mxu0 0
    %2493 = vmatpush1.bf16.msra.mxu0 %v2387
    %2494 = vmatprep.subr.bf16.mxu0 0
    %2495 = vmatpush1.bf16.msra.mxu0 %v2388
    %2496 = vmatprep.subr.bf16.mxu0 0
    %2497 = vmatpush1.bf16.msra.mxu0 %v2389
    %2498 = vmatprep.subr.bf16.mxu0 0
    %2499 = vmatpush1.bf16.msra.mxu0 %v2390
    %2500 = vmatprep.subr.bf16.mxu0 0
    %2501 = vmatpush1.bf16.msra.mxu0 %v2391
    %2502 = vmatprep.subr.bf16.mxu0 0
    %2503 = vmatpush1.bf16.msra.mxu0 %v2392
    %2504 = vmatprep.subr.bf16.mxu0 0
    %2505 = vmatpush1.bf16.msra.mxu0 %v2393
    %2506 = vmatprep.subr.bf16.mxu0 0
    %2507 = vmatpush1.bf16.msra.mxu0 %v2394
    %2508 = vmatprep.mubr.bf16.mxu0 %v2159
    %2509 = vmatmul.mubr.bf16.gmra.mrb[0].mxu0 %v2158
    %v2510 = vpop.f32.mrb[0].mxu0
    %v2511 = vadd.f32 %v2462, %v2510
    %v2512 = vpop.f32.mrb[0].mxu0
    %v2513 = vpop.f32.mrb[0].mxu0
    %v2514 = vadd.f32 %v2465, %v2513
    %v2515 = vpop.f32.mrb[0].mxu0
    %2516 = vmatprep.mubr.bf16.mxu0 %v2163
    %2517 = vmatmul.mubr.bf16.gmra.mrb[0].mxu0 %v2162
    %v2518 = vpop.f32.mrb[0].mxu0
    %v2519 = vadd.f32 %v2470, %v2518
    %v2520 = vpop.f32.mrb[0].mxu0
    %v2521 = vpop.f32.mrb[0].mxu0
    %v2522 = vadd.f32 %v2473, %v2521
    %v2523 = vpop.f32.mrb[0].mxu0
    %2524 = vdwg.mxu0
    %v2525 = vadd.f32 %v1636, %v2511
    %v2526 = vadd.f32 %v1637, %v2514
    %v2527 = vadd.f32 %v1638, %v2519
    %v2528 = vadd.f32 %v1639, %v2522
    %2529 = vst [vmem:[%s13] sm:$0xff] %v2525
    %2530 = vst [vmem:[%s13 + $0x8] sm:$0xff] %v2526
    %2531 = vst [vmem:[%s13 + $0x10] sm:$0xff] %v2527
    %2532 = vst [vmem:[%s13 + $0x18] sm:$0xff] %v2528
    // Predicated region
    $region82: #{residual_attention_block.1} parent=1 // pred_check
      _
    $region83: #{residual_attention_block.1} parent=1 // pred_check_branch
      %2534 = sbr.rel (0) target = $region85
    $region84: #{residual_attention_block.1} parent=1 // pred_region
      _
    $region85: #{residual_attention_block.1} parent=1 // pred_fallthru
      _
    // Predicated region
    $region86: #{residual_attention_block.1} parent=1 // pred_check
      _
    $region87: #{residual_attention_block.1} parent=1 // pred_check_branch
      %2536 = sbr.rel (0) target = $region89
    $region88: #{residual_attention_block.1} parent=1 // pred_region
      _
    $region89: #{residual_attention_block.1} parent=1 // pred_fallthru
      _
    %2537 = vsyncpa [#allocation3], 1
    %2538 = vsyncpa [#allocation5], 1
    %2539 = vsyncpa [#allocation8], 1
    %2540 = vsyncpa [#allocation11], 1

</llo_original>
